<compile_context>
chip_gen: v7x
topology: tpu7x:2x2x1
jax: 0.10.0
libtpu: 0.0.40
codegen_flags: <defaults>
</compile_context>

<pallas_src>
import numpy as np
import jax
import jax.numpy as jnp
from jax import lax
from jax.experimental import pallas as pl
from jax.experimental.pallas import tpu as pltpu

# small, TPU-friendly stand-in sizes for bert-base (hidden 768 -> 32, etc.)
B, S, H = 2, 8, 32          # batch, sequence, hidden size
FFN = 64                    # encoder intermediate size
HEAD_HIDDEN = 256           # task-head hidden size (as in the module)
NUM_CLASSES = 5
NER_TAGS = 9
VOCAB = 100
LN_EPS = 1e-5
LANE = 128                  # lane-dense padded width for the small head outputs


# ---------------------------------------------------------------------------
# in-kernel helpers
# ---------------------------------------------------------------------------
def _mm(a, b, transpose_b=False):
    """bf16 MXU matmul with f32 accumulation (a @ b or a @ b.T)."""
    dn = (((1,), (1,) if transpose_b else (0,)), ((), ()))
    return lax.dot_general(a.astype(jnp.bfloat16), b.astype(jnp.bfloat16),
                           dn, preferred_element_type=jnp.float32)


def _layer_norm(z, g, b, eps=LN_EPS):
    mu = jnp.mean(z, axis=-1, keepdims=True)
    var = jnp.mean((z - mu) ** 2, axis=-1, keepdims=True)
    return (z - mu) * lax.rsqrt(var + eps) * g + b


# ---------------------------------------------------------------------------
# Fused kernel: one grid step == one batch example.
#   encoder layer -> masked mean pooling -> LayerNorm -> L2 normalize
#   -> classification head, NER head.
# ---------------------------------------------------------------------------
def fused_kernel(x_ref, mask_ref,
                 wqkv_ref, bqkv_ref, wo_ref, bo_ref, ln1g_ref, ln1b_ref,
                 w1_ref, b1_ref, w2_ref, b2_ref, ln2g_ref, ln2b_ref,
                 lng_ref, lnb_ref,
                 wc1_ref, bc1_ref, wc2_ref, bc2_ref,
                 wn1_ref, bn1_ref, wn2_ref, bn2_ref,
                 emb_ref, cls_ref, ner_ref):
    x = x_ref[...]                               # (S, H) f32 token embeddings
    mask = mask_ref[...]                         # (1, S) f32 attention mask

    # ------------------------------------------------------------------
    # TODO(synk): the pretrained multi-layer multi-head BertModel cannot be
    # reproduced in-script; it is replaced by ONE deterministic single-head
    # transformer encoder layer computed entirely inside this kernel.
    # ------------------------------------------------------------------
    qkv = _mm(x, wqkv_ref[...]) + bqkv_ref[...]          # fused QKV: (S, 3H)
    q = qkv[:, :H]
    k = qkv[:, H:2 * H]
    v = qkv[:, 2 * H:]

    # additive attention bias built in-kernel from the mask (broadcast over q)
    bias = (1.0 - mask) * -1e9                           # (1, S)
    s = _mm(q, k, transpose_b=True) * (1.0 / float(np.sqrt(H))) + bias  # (S, S)
    s = s - jnp.max(s, axis=-1, keepdims=True)
    p = jnp.exp(s)
    p = p * pl.reciprocal(jnp.sum(p, axis=-1, keepdims=True), approx=True)
    ctx = _mm(p, v)                                      # (S, H)

    attn = _mm(ctx, wo_ref[...]) + bo_ref[...]
    h1 = _layer_norm(x + attn, ln1g_ref[...], ln1b_ref[...])

    ff = _mm(h1, w1_ref[...]) + b1_ref[...]
    # TODO(synk): tanh GELU stand-in; BERT reference uses erf GELU.
    ff = jax.nn.gelu(ff, approximate=True)
    ff = _mm(ff, w2_ref[...]) + b2_ref[...]
    h2 = _layer_norm(h1 + ff, ln2g_ref[...], ln2b_ref[...])   # last_hidden_state (S, H)

    # ------------------------------------------------------------------
    # Heads defined by the PyTorch module (Dropout == identity at inference).
    # ------------------------------------------------------------------
    # masked mean pooling as a (1,S)@(S,H) matmul; counts clamped (torch-style)
    summed = jnp.dot(mask, h2, preferred_element_type=jnp.float32)       # (1, H)
    counts = jnp.maximum(jnp.sum(mask, axis=-1, keepdims=True), 1e-9)    # (1, 1)
    pooled = summed * pl.reciprocal(counts, approx=True)

    se = _layer_norm(pooled, lng_ref[...], lnb_ref[...])                 # (1, H)
    sq = jnp.sum(se * se, axis=-1, keepdims=True)
    emb = se * lax.rsqrt(jnp.maximum(sq, 1e-24))   # F.normalize(p=2), denom clamp 1e-12
    emb_ref[...] = jnp.concatenate(
        [emb, jnp.zeros((1, LANE - H), jnp.float32)], axis=-1)           # lane-dense

    # classification head: Linear -> ReLU -> (Dropout=id) -> Linear (padded to 128)
    hc = jnp.maximum(_mm(emb, wc1_ref[...]) + bc1_ref[...], 0.0)         # (1, 256)
    cls_ref[...] = _mm(hc, wc2_ref[...]) + bc2_ref[...]                  # (1, 128)

    # NER head applied token-wise to last_hidden_state (padded to 128)
    hn = jnp.maximum(_mm(h2, wn1_ref[...]) + bn1_ref[...], 0.0)          # (S, 256)
    ner_ref[...] = _mm(hn, wn2_ref[...]) + bn2_ref[...]                  # (S, 128)


# ---------------------------------------------------------------------------
# Wrappers
# ---------------------------------------------------------------------------
def _param_spec(shape):
    nd = len(shape)
    return pl.BlockSpec(shape, lambda b, nd=nd: (0,) * nd)


def prepare_kernel_params(p):
    """Fuse QKV, zero-pad tiny head outputs to 128 lanes, cast weights to bf16."""
    def pad_cols(w, width):
        return jnp.concatenate(
            [w, jnp.zeros((w.shape[0], width - w.shape[1]), w.dtype)], axis=1)

    bf = lambda w: w.astype(jnp.bfloat16)
    return {
        'wqkv': bf(jnp.concatenate([p['wq'], p['wk'], p['wv']], axis=1)),
        'bqkv': jnp.concatenate([p['bq'], p['bk'], p['bv']], axis=1),
        'wo': bf(p['wo']), 'bo': p['bo'],
        'ln1g': p['ln1g'], 'ln1b': p['ln1b'],
        'w1': bf(p['w1']), 'b1': p['b1'],
        'w2': bf(p['w2']), 'b2': p['b2'],
        'ln2g': p['ln2g'], 'ln2b': p['ln2b'],
        'lng': p['lng'], 'lnb': p['lnb'],
        'wc1': bf(p['wc1']), 'bc1': p['bc1'],
        'wc2p': bf(pad_cols(p['wc2'], LANE)), 'bc2p': pad_cols(p['bc2'], LANE),
        'wn1': bf(p['wn1']), 'bn1': p['bn1'],
        'wn2p': bf(pad_cols(p['wn2'], LANE)), 'bn2p': pad_cols(p['bn2'], LANE),
    }


def run_fused(x, mask_row, kp):
    args = (x, mask_row,
            kp['wqkv'], kp['bqkv'], kp['wo'], kp['bo'], kp['ln1g'], kp['ln1b'],
            kp['w1'], kp['b1'], kp['w2'], kp['b2'], kp['ln2g'], kp['ln2b'],
            kp['lng'], kp['lnb'],
            kp['wc1'], kp['bc1'], kp['wc2p'], kp['bc2p'],
            kp['wn1'], kp['bn1'], kp['wn2p'], kp['bn2p'])

    in_specs = [
        pl.BlockSpec((None, S, H), lambda b: (b, 0, 0)),   # per-example hidden states
        pl.BlockSpec((None, 1, S), lambda b: (b, 0, 0)),   # per-example mask row
    ] + [_param_spec(a.shape) for a in args[2:]]

    out_shapes = (
        jax.ShapeDtypeStruct((B, 1, LANE), jnp.float32),   # embedding (padded)
        jax.ShapeDtypeStruct((B, 1, LANE), jnp.float32),   # classification (padded)
        jax.ShapeDtypeStruct((B, S, LANE), jnp.float32),   # ner (padded)
    )
    out_specs = (
        pl.BlockSpec((None, 1, LANE), lambda b: (b, 0, 0)),
        pl.BlockSpec((None, 1, LANE), lambda b: (b, 0, 0)),
        pl.BlockSpec((None, S, LANE), lambda b: (b, 0, 0)),
    )

    return pl.pallas_call(
        fused_kernel,
        grid=(B,),
        in_specs=in_specs,
        out_specs=out_specs,
        out_shape=out_shapes,
        compiler_params=pltpu.CompilerParams(
            dimension_semantics=("parallel",)),
    )(*args)


def multi_task_forward(input_ids, attention_mask, params):
    # TODO(synk): data-dependent embedding-table gather stays in plain JAX glue.
    x = (params['tok_emb'][input_ids] + params['pos_emb'][None, :, :]).astype(jnp.float32)
    am = attention_mask.astype(jnp.float32)
    mask_row = am[:, None, :]                              # (B, 1, S)

    kp = prepare_kernel_params(params)
    emb_p, cls_p, ner_p = run_fused(x, mask_row, kp)

    return {
        'embedding': emb_p[:, 0, :H],
        'classification': cls_p[:, 0, :NUM_CLASSES],
        'ner': ner_p[:, :, :NER_TAGS],
    }


if __name__ == "__main__":
    key = jax.random.PRNGKey(0)
    ks = jax.random.split(key, 16)

    def w_init(k, shape, scale=0.02):
        return (scale * jax.random.normal(k, shape)).astype(jnp.float32)

    params = {
        'tok_emb': w_init(ks[0], (VOCAB, H)),
        'pos_emb': w_init(ks[1], (S, H)),
        # encoder layer
        'wq': w_init(ks[2], (H, H)), 'bq': jnp.zeros((1, H), jnp.float32),
        'wk': w_init(ks[3], (H, H)), 'bk': jnp.zeros((1, H), jnp.float32),
        'wv': w_init(ks[4], (H, H)), 'bv': jnp.zeros((1, H), jnp.float32),
        'wo': w_init(ks[5], (H, H)), 'bo': jnp.zeros((1, H), jnp.float32),
        'ln1g': jnp.ones((1, H), jnp.float32), 'ln1b': jnp.zeros((1, H), jnp.float32),
        'w1': w_init(ks[6], (H, FFN)), 'b1': jnp.zeros((1, FFN), jnp.float32),
        'w2': w_init(ks[7], (FFN, H)), 'b2': jnp.zeros((1, H), jnp.float32),
        'ln2g': jnp.ones((1, H), jnp.float32), 'ln2b': jnp.zeros((1, H), jnp.float32),
        # pooled-embedding LayerNorm (self.layer_norm)
        'lng': jnp.ones((1, H), jnp.float32), 'lnb': jnp.zeros((1, H), jnp.float32),
        # classification head
        'wc1': w_init(ks[8], (H, HEAD_HIDDEN)), 'bc1': jnp.zeros((1, HEAD_HIDDEN), jnp.float32),
        'wc2': w_init(ks[9], (HEAD_HIDDEN, NUM_CLASSES)), 'bc2': jnp.zeros((1, NUM_CLASSES), jnp.float32),
        # NER head
        'wn1': w_init(ks[10], (H, HEAD_HIDDEN)), 'bn1': jnp.zeros((1, HEAD_HIDDEN), jnp.float32),
        'wn2': w_init(ks[11], (HEAD_HIDDEN, NER_TAGS)), 'bn2': jnp.zeros((1, NER_TAGS), jnp.float32),
    }

    input_ids = jax.random.randint(ks[12], (B, S), 0, VOCAB)
    attention_mask = jnp.array([[1, 1, 1, 1, 1, 1, 1, 1],
                                [1, 1, 1, 1, 1, 1, 0, 0]], dtype=jnp.float32)

    results = multi_task_forward(input_ids, attention_mask, params)
    results = jax.block_until_ready(results)

    assert results['embedding'].shape == (B, H)
    assert results['classification'].shape == (B, NUM_CLASSES)
    assert results['ner'].shape == (B, S, NER_TAGS)
    # embeddings are L2-normalized
    norms = np.asarray(jnp.sum(results['embedding'] ** 2, axis=1))
    assert np.allclose(norms, 1.0, atol=1e-4)

    print("KERNEL_OK")
</pallas_src>

<mosaic_0001>
module attributes {stable_mosaic.version = 11 : i64} {
  func.func @fused_kernel(%arg0: i32, %arg1: memref<1x8x32xf32, #tpu.memory_space<vmem>>, %arg2: memref<1x1x8xf32, #tpu.memory_space<vmem>>, %arg3: memref<32x96xbf16, #tpu.memory_space<vmem>>, %arg4: memref<1x96xf32, #tpu.memory_space<vmem>>, %arg5: memref<32x32xbf16, #tpu.memory_space<vmem>>, %arg6: memref<1x32xf32, #tpu.memory_space<vmem>>, %arg7: memref<1x32xf32, #tpu.memory_space<vmem>>, %arg8: memref<1x32xf32, #tpu.memory_space<vmem>>, %arg9: memref<32x64xbf16, #tpu.memory_space<vmem>>, %arg10: memref<1x64xf32, #tpu.memory_space<vmem>>, %arg11: memref<64x32xbf16, #tpu.memory_space<vmem>>, %arg12: memref<1x32xf32, #tpu.memory_space<vmem>>, %arg13: memref<1x32xf32, #tpu.memory_space<vmem>>, %arg14: memref<1x32xf32, #tpu.memory_space<vmem>>, %arg15: memref<1x32xf32, #tpu.memory_space<vmem>>, %arg16: memref<1x32xf32, #tpu.memory_space<vmem>>, %arg17: memref<32x256xbf16, #tpu.memory_space<vmem>>, %arg18: memref<1x256xf32, #tpu.memory_space<vmem>>, %arg19: memref<256x128xbf16, #tpu.memory_space<vmem>>, %arg20: memref<1x128xf32, #tpu.memory_space<vmem>>, %arg21: memref<32x256xbf16, #tpu.memory_space<vmem>>, %arg22: memref<1x256xf32, #tpu.memory_space<vmem>>, %arg23: memref<256x128xbf16, #tpu.memory_space<vmem>>, %arg24: memref<1x128xf32, #tpu.memory_space<vmem>>, %arg25: memref<1x1x128xf32, #tpu.memory_space<vmem>>, %arg26: memref<1x1x128xf32, #tpu.memory_space<vmem>>, %arg27: memref<1x8x128xf32, #tpu.memory_space<vmem>>) attributes {dimension_semantics = [#tpu.dimension_semantics<parallel>], iteration_bounds = array<i64: 2>, scalar_prefetch = 0 : i64, scratch_operands = 0 : i64, tpu.core_type = #tpu.core_type<tc>, window_params = [{transform_indices = @transform_0, window_bounds = array<i64: 1, 8, 32>}, {transform_indices = @transform_1, window_bounds = array<i64: 1, 1, 8>}, {pipeline_mode = #tpu.pipeline_mode<synchronous>, transform_indices = @transform_2, window_bounds = array<i64: 32, 96>}, {pipeline_mode = #tpu.pipeline_mode<synchronous>, transform_indices = @transform_3, window_bounds = array<i64: 1, 96>}, {pipeline_mode = #tpu.pipeline_mode<synchronous>, transform_indices = @transform_4, window_bounds = array<i64: 32, 32>}, {pipeline_mode = #tpu.pipeline_mode<synchronous>, transform_indices = @transform_5, window_bounds = array<i64: 1, 32>}, {pipeline_mode = #tpu.pipeline_mode<synchronous>, transform_indices = @transform_6, window_bounds = array<i64: 1, 32>}, {pipeline_mode = #tpu.pipeline_mode<synchronous>, transform_indices = @transform_7, window_bounds = array<i64: 1, 32>}, {pipeline_mode = #tpu.pipeline_mode<synchronous>, transform_indices = @transform_8, window_bounds = array<i64: 32, 64>}, {pipeline_mode = #tpu.pipeline_mode<synchronous>, transform_indices = @transform_9, window_bounds = array<i64: 1, 64>}, {pipeline_mode = #tpu.pipeline_mode<synchronous>, transform_indices = @transform_10, window_bounds = array<i64: 64, 32>}, {pipeline_mode = #tpu.pipeline_mode<synchronous>, transform_indices = @transform_11, window_bounds = array<i64: 1, 32>}, {pipeline_mode = #tpu.pipeline_mode<synchronous>, transform_indices = @transform_12, window_bounds = array<i64: 1, 32>}, {pipeline_mode = #tpu.pipeline_mode<synchronous>, transform_indices = @transform_13, window_bounds = array<i64: 1, 32>}, {pipeline_mode = #tpu.pipeline_mode<synchronous>, transform_indices = @transform_14, window_bounds = array<i64: 1, 32>}, {pipeline_mode = #tpu.pipeline_mode<synchronous>, transform_indices = @transform_15, window_bounds = array<i64: 1, 32>}, {pipeline_mode = #tpu.pipeline_mode<synchronous>, transform_indices = @transform_16, window_bounds = array<i64: 32, 256>}, {pipeline_mode = #tpu.pipeline_mode<synchronous>, transform_indices = @transform_17, window_bounds = array<i64: 1, 256>}, {pipeline_mode = #tpu.pipeline_mode<synchronous>, transform_indices = @transform_18, window_bounds = array<i64: 256, 128>}, {pipeline_mode = #tpu.pipeline_mode<synchronous>, transform_indices = @transform_19, window_bounds = array<i64: 1, 128>}, {pipeline_mode = #tpu.pipeline_mode<synchronous>, transform_indices = @transform_20, window_bounds = array<i64: 32, 256>}, {pipeline_mode = #tpu.pipeline_mode<synchronous>, transform_indices = @transform_21, window_bounds = array<i64: 1, 256>}, {pipeline_mode = #tpu.pipeline_mode<synchronous>, transform_indices = @transform_22, window_bounds = array<i64: 256, 128>}, {pipeline_mode = #tpu.pipeline_mode<synchronous>, transform_indices = @transform_23, window_bounds = array<i64: 1, 128>}, {transform_indices = @transform_24, window_bounds = array<i64: 1, 1, 128>}, {transform_indices = @transform_25, window_bounds = array<i64: 1, 1, 128>}, {transform_indices = @transform_26, window_bounds = array<i64: 1, 8, 128>}]} {
    %c0 = arith.constant 0 : index
    %c0_0 = arith.constant 0 : index
    %c0_1 = arith.constant 0 : index
    %0 = vector.load %arg1[%c0, %c0_0, %c0_1] : memref<1x8x32xf32, #tpu.memory_space<vmem>>, vector<1x8x32xf32>
    %1 = vector.shape_cast %0 : vector<1x8x32xf32> to vector<8x32xf32>
    %c0_2 = arith.constant 0 : index
    %c0_3 = arith.constant 0 : index
    %c0_4 = arith.constant 0 : index
    %2 = vector.load %arg2[%c0_2, %c0_3, %c0_4] : memref<1x1x8xf32, #tpu.memory_space<vmem>>, vector<1x1x8xf32>
    %3 = vector.shape_cast %2 : vector<1x1x8xf32> to vector<1x8xf32>
    %c0_5 = arith.constant 0 : index
    %c0_6 = arith.constant 0 : index
    %4 = vector.load %arg3[%c0_5, %c0_6] : memref<32x96xbf16, #tpu.memory_space<vmem>>, vector<32x96xbf16>
    %5 = arith.truncf %1 : vector<8x32xf32> to vector<8x32xbf16>
    %cst = arith.constant dense<0.000000e+00> : vector<8x96xf32>
    %6 = tpu.matmul %5, %4, %cst {dimension_numbers = #tpu.dot_dimension_numbers<[1], [0], [0], [1], [0, 0, 1, 1], [], []>} : vector<8x32xbf16>, vector<32x96xbf16>, vector<8x96xf32> -> vector<8x96xf32>
    %c0_7 = arith.constant 0 : index
    %c0_8 = arith.constant 0 : index
    %7 = vector.load %arg4[%c0_7, %c0_8] : memref<1x96xf32, #tpu.memory_space<vmem>>, vector<1x96xf32>
    %8 = vector.broadcast %7 : vector<1x96xf32> to vector<8x96xf32>
    %9 = arith.addf %6, %8 : vector<8x96xf32>
    %10 = vector.extract_strided_slice %9 {offsets = [0, 0], sizes = [8, 32], strides = [1, 1]} : vector<8x96xf32> to vector<8x32xf32>
    %11 = vector.extract_strided_slice %9 {offsets = [0, 32], sizes = [8, 32], strides = [1, 1]} : vector<8x96xf32> to vector<8x32xf32>
    %12 = vector.extract_strided_slice %9 {offsets = [0, 64], sizes = [8, 32], strides = [1, 1]} : vector<8x96xf32> to vector<8x32xf32>
    %cst_9 = arith.constant 1.000000e+00 : f32
    %13 = vector.broadcast %cst_9 : f32 to vector<1x8xf32>
    %14 = arith.subf %13, %3 : vector<1x8xf32>
    %cst_10 = arith.constant -1.000000e+09 : f32
    %15 = vector.broadcast %cst_10 : f32 to vector<1x8xf32>
    %16 = arith.mulf %14, %15 : vector<1x8xf32>
    %17 = arith.truncf %10 : vector<8x32xf32> to vector<8x32xbf16>
    %18 = arith.truncf %11 : vector<8x32xf32> to vector<8x32xbf16>
    %cst_11 = arith.constant dense<0.000000e+00> : vector<8x8xf32>
    %19 = tpu.matmul %17, %18, %cst_11 {dimension_numbers = #tpu.dot_dimension_numbers<[1], [1], [0], [0], [0, 0, 1, 0], [], []>} : vector<8x32xbf16>, vector<8x32xbf16>, vector<8x8xf32> -> vector<8x8xf32>
    %cst_12 = arith.constant 0.176776692 : f32
    %20 = vector.broadcast %cst_12 : f32 to vector<8x8xf32>
    %21 = arith.mulf %19, %20 : vector<8x8xf32>
    %22 = vector.broadcast %16 : vector<1x8xf32> to vector<8x8xf32>
    %23 = arith.addf %21, %22 : vector<8x8xf32>
    %cst_13 = arith.constant dense<0xFF800000> : vector<8xf32>
    %24 = vector.multi_reduction <maximumf>, %23, %cst_13 [1] : vector<8x8xf32> to vector<8xf32>
    %25 = vector.shape_cast %24 : vector<8xf32> to vector<8x1xf32>
    %26 = vector.broadcast %25 : vector<8x1xf32> to vector<8x8xf32>
    %27 = arith.subf %23, %26 : vector<8x8xf32>
    %28 = math.exp %27 : vector<8x8xf32>
    %cst_14 = arith.constant dense<0.000000e+00> : vector<8xf32>
    %29 = vector.multi_reduction <add>, %28, %cst_14 [1] : vector<8x8xf32> to vector<8xf32>
    %30 = vector.shape_cast %29 : vector<8xf32> to vector<8x1xf32>
    %31 = tpu.reciprocal %30 {approx = true} : vector<8x1xf32> -> vector<8x1xf32>
    %32 = vector.broadcast %31 : vector<8x1xf32> to vector<8x8xf32>
    %33 = arith.mulf %28, %32 : vector<8x8xf32>
    %34 = arith.truncf %33 : vector<8x8xf32> to vector<8x8xbf16>
    %35 = arith.truncf %12 : vector<8x32xf32> to vector<8x32xbf16>
    %cst_15 = arith.constant dense<0.000000e+00> : vector<8x32xf32>
    %36 = tpu.matmul %34, %35, %cst_15 {dimension_numbers = #tpu.dot_dimension_numbers<[1], [0], [0], [1], [0, 0, 1, 1], [], []>} : vector<8x8xbf16>, vector<8x32xbf16>, vector<8x32xf32> -> vector<8x32xf32>
    %c0_16 = arith.constant 0 : index
    %c0_17 = arith.constant 0 : index
    %37 = vector.load %arg5[%c0_16, %c0_17] : memref<32x32xbf16, #tpu.memory_space<vmem>>, vector<32x32xbf16>
    %38 = arith.truncf %36 : vector<8x32xf32> to vector<8x32xbf16>
    %cst_18 = arith.constant dense<0.000000e+00> : vector<8x32xf32>
    %39 = tpu.matmul %38, %37, %cst_18 {dimension_numbers = #tpu.dot_dimension_numbers<[1], [0], [0], [1], [0, 0, 1, 1], [], []>} : vector<8x32xbf16>, vector<32x32xbf16>, vector<8x32xf32> -> vector<8x32xf32>
    %c0_19 = arith.constant 0 : index
    %c0_20 = arith.constant 0 : index
    %40 = vector.load %arg6[%c0_19, %c0_20] : memref<1x32xf32, #tpu.memory_space<vmem>>, vector<1x32xf32>
    %41 = vector.broadcast %40 : vector<1x32xf32> to vector<8x32xf32>
    %42 = arith.addf %39, %41 : vector<8x32xf32>
    %43 = arith.addf %1, %42 : vector<8x32xf32>
    %c0_21 = arith.constant 0 : index
    %c0_22 = arith.constant 0 : index
    %44 = vector.load %arg7[%c0_21, %c0_22] : memref<1x32xf32, #tpu.memory_space<vmem>>, vector<1x32xf32>
    %c0_23 = arith.constant 0 : index
    %c0_24 = arith.constant 0 : index
    %45 = vector.load %arg8[%c0_23, %c0_24] : memref<1x32xf32, #tpu.memory_space<vmem>>, vector<1x32xf32>
    %cst_25 = arith.constant dense<0.000000e+00> : vector<8xf32>
    %46 = vector.multi_reduction <add>, %43, %cst_25 [1] : vector<8x32xf32> to vector<8xf32>
    %47 = vector.shape_cast %46 : vector<8xf32> to vector<8x1xf32>
    %cst_26 = arith.constant 3.200000e+01 : f32
    %48 = vector.broadcast %cst_26 : f32 to vector<8x1xf32>
    %49 = arith.divf %47, %48 : vector<8x1xf32>
    %50 = vector.broadcast %49 : vector<8x1xf32> to vector<8x32xf32>
    %51 = arith.subf %43, %50 : vector<8x32xf32>
    %52 = arith.mulf %51, %51 : vector<8x32xf32>
    %cst_27 = arith.constant dense<0.000000e+00> : vector<8xf32>
    %53 = vector.multi_reduction <add>, %52, %cst_27 [1] : vector<8x32xf32> to vector<8xf32>
    %54 = vector.shape_cast %53 : vector<8xf32> to vector<8x1xf32>
    %cst_28 = arith.constant 3.200000e+01 : f32
    %55 = vector.broadcast %cst_28 : f32 to vector<8x1xf32>
    %56 = arith.divf %54, %55 : vector<8x1xf32>
    %57 = vector.broadcast %49 : vector<8x1xf32> to vector<8x32xf32>
    %58 = arith.subf %43, %57 : vector<8x32xf32>
    %cst_29 = arith.constant 9.99999974E-6 : f32
    %59 = vector.broadcast %cst_29 : f32 to vector<8x1xf32>
    %60 = arith.addf %56, %59 : vector<8x1xf32>
    %61 = math.rsqrt %60 : vector<8x1xf32>
    %62 = vector.broadcast %61 : vector<8x1xf32> to vector<8x32xf32>
    %63 = arith.mulf %58, %62 : vector<8x32xf32>
    %64 = vector.broadcast %44 : vector<1x32xf32> to vector<8x32xf32>
    %65 = arith.mulf %63, %64 : vector<8x32xf32>
    %66 = vector.broadcast %45 : vector<1x32xf32> to vector<8x32xf32>
    %67 = arith.addf %65, %66 : vector<8x32xf32>
    %c0_30 = arith.constant 0 : index
    %c0_31 = arith.constant 0 : index
    %68 = vector.load %arg9[%c0_30, %c0_31] : memref<32x64xbf16, #tpu.memory_space<vmem>>, vector<32x64xbf16>
    %69 = arith.truncf %67 : vector<8x32xf32> to vector<8x32xbf16>
    %cst_32 = arith.constant dense<0.000000e+00> : vector<8x64xf32>
    %70 = tpu.matmul %69, %68, %cst_32 {dimension_numbers = #tpu.dot_dimension_numbers<[1], [0], [0], [1], [0, 0, 1, 1], [], []>} : vector<8x32xbf16>, vector<32x64xbf16>, vector<8x64xf32> -> vector<8x64xf32>
    %c0_33 = arith.constant 0 : index
    %c0_34 = arith.constant 0 : index
    %71 = vector.load %arg10[%c0_33, %c0_34] : memref<1x64xf32, #tpu.memory_space<vmem>>, vector<1x64xf32>
    %72 = vector.broadcast %71 : vector<1x64xf32> to vector<8x64xf32>
    %73 = arith.addf %70, %72 : vector<8x64xf32>
    %74 = arith.mulf %73, %73 : vector<8x64xf32>
    %75 = arith.mulf %73, %74 : vector<8x64xf32>
    %cst_35 = arith.constant 4.471500e-02 : f32
    %76 = vector.broadcast %cst_35 : f32 to vector<8x64xf32>
    %77 = arith.mulf %76, %75 : vector<8x64xf32>
    %78 = arith.addf %73, %77 : vector<8x64xf32>
    %cst_36 = arith.constant 0.797884583 : f32
    %79 = vector.broadcast %cst_36 : f32 to vector<8x64xf32>
    %80 = arith.mulf %79, %78 : vector<8x64xf32>
    %81 = math.tanh %80 : vector<8x64xf32>
    %cst_37 = arith.constant 1.000000e+00 : f32
    %82 = vector.broadcast %cst_37 : f32 to vector<8x64xf32>
    %83 = arith.addf %82, %81 : vector<8x64xf32>
    %cst_38 = arith.constant 5.000000e-01 : f32
    %84 = vector.broadcast %cst_38 : f32 to vector<8x64xf32>
    %85 = arith.mulf %84, %83 : vector<8x64xf32>
    %86 = arith.mulf %73, %85 : vector<8x64xf32>
    %c0_39 = arith.constant 0 : index
    %c0_40 = arith.constant 0 : index
    %87 = vector.load %arg11[%c0_39, %c0_40] : memref<64x32xbf16, #tpu.memory_space<vmem>>, vector<64x32xbf16>
    %88 = arith.truncf %86 : vector<8x64xf32> to vector<8x64xbf16>
    %cst_41 = arith.constant dense<0.000000e+00> : vector<8x32xf32>
    %89 = tpu.matmul %88, %87, %cst_41 {dimension_numbers = #tpu.dot_dimension_numbers<[1], [0], [0], [1], [0, 0, 1, 1], [], []>} : vector<8x64xbf16>, vector<64x32xbf16>, vector<8x32xf32> -> vector<8x32xf32>
    %c0_42 = arith.constant 0 : index
    %c0_43 = arith.constant 0 : index
    %90 = vector.load %arg12[%c0_42, %c0_43] : memref<1x32xf32, #tpu.memory_space<vmem>>, vector<1x32xf32>
    %91 = vector.broadcast %90 : vector<1x32xf32> to vector<8x32xf32>
    %92 = arith.addf %89, %91 : vector<8x32xf32>
    %93 = arith.addf %67, %92 : vector<8x32xf32>
    %c0_44 = arith.constant 0 : index
    %c0_45 = arith.constant 0 : index
    %94 = vector.load %arg13[%c0_44, %c0_45] : memref<1x32xf32, #tpu.memory_space<vmem>>, vector<1x32xf32>
    %c0_46 = arith.constant 0 : index
    %c0_47 = arith.constant 0 : index
    %95 = vector.load %arg14[%c0_46, %c0_47] : memref<1x32xf32, #tpu.memory_space<vmem>>, vector<1x32xf32>
    %cst_48 = arith.constant dense<0.000000e+00> : vector<8xf32>
    %96 = vector.multi_reduction <add>, %93, %cst_48 [1] : vector<8x32xf32> to vector<8xf32>
    %97 = vector.shape_cast %96 : vector<8xf32> to vector<8x1xf32>
    %cst_49 = arith.constant 3.200000e+01 : f32
    %98 = vector.broadcast %cst_49 : f32 to vector<8x1xf32>
    %99 = arith.divf %97, %98 : vector<8x1xf32>
    %100 = vector.broadcast %99 : vector<8x1xf32> to vector<8x32xf32>
    %101 = arith.subf %93, %100 : vector<8x32xf32>
    %102 = arith.mulf %101, %101 : vector<8x32xf32>
    %cst_50 = arith.constant dense<0.000000e+00> : vector<8xf32>
    %103 = vector.multi_reduction <add>, %102, %cst_50 [1] : vector<8x32xf32> to vector<8xf32>
    %104 = vector.shape_cast %103 : vector<8xf32> to vector<8x1xf32>
    %cst_51 = arith.constant 3.200000e+01 : f32
    %105 = vector.broadcast %cst_51 : f32 to vector<8x1xf32>
    %106 = arith.divf %104, %105 : vector<8x1xf32>
    %107 = vector.broadcast %99 : vector<8x1xf32> to vector<8x32xf32>
    %108 = arith.subf %93, %107 : vector<8x32xf32>
    %cst_52 = arith.constant 9.99999974E-6 : f32
    %109 = vector.broadcast %cst_52 : f32 to vector<8x1xf32>
    %110 = arith.addf %106, %109 : vector<8x1xf32>
    %111 = math.rsqrt %110 : vector<8x1xf32>
    %112 = vector.broadcast %111 : vector<8x1xf32> to vector<8x32xf32>
    %113 = arith.mulf %108, %112 : vector<8x32xf32>
    %114 = vector.broadcast %94 : vector<1x32xf32> to vector<8x32xf32>
    %115 = arith.mulf %113, %114 : vector<8x32xf32>
    %116 = vector.broadcast %95 : vector<1x32xf32> to vector<8x32xf32>
    %117 = arith.addf %115, %116 : vector<8x32xf32>
    %cst_53 = arith.constant dense<0.000000e+00> : vector<1x32xf32>
    %118 = tpu.matmul %3, %117, %cst_53 {dimension_numbers = #tpu.dot_dimension_numbers<[1], [0], [0], [1], [0, 0, 1, 1], [], []>} : vector<1x8xf32>, vector<8x32xf32>, vector<1x32xf32> -> vector<1x32xf32>
    %cst_54 = arith.constant dense<0.000000e+00> : vector<1xf32>
    %119 = vector.multi_reduction <add>, %3, %cst_54 [1] : vector<1x8xf32> to vector<1xf32>
    %120 = vector.shape_cast %119 : vector<1xf32> to vector<1x1xf32>
    %cst_55 = arith.constant 9.99999971E-10 : f32
    %121 = vector.broadcast %cst_55 : f32 to vector<1x1xf32>
    %122 = arith.maximumf %120, %121 : vector<1x1xf32>
    %123 = tpu.reciprocal %122 {approx = true} : vector<1x1xf32> -> vector<1x1xf32>
    %124 = vector.broadcast %123 : vector<1x1xf32> to vector<1x32xf32>
    %125 = arith.mulf %118, %124 : vector<1x32xf32>
    %c0_56 = arith.constant 0 : index
    %c0_57 = arith.constant 0 : index
    %126 = vector.load %arg15[%c0_56, %c0_57] : memref<1x32xf32, #tpu.memory_space<vmem>>, vector<1x32xf32>
    %c0_58 = arith.constant 0 : index
    %c0_59 = arith.constant 0 : index
    %127 = vector.load %arg16[%c0_58, %c0_59] : memref<1x32xf32, #tpu.memory_space<vmem>>, vector<1x32xf32>
    %cst_60 = arith.constant dense<0.000000e+00> : vector<1xf32>
    %128 = vector.multi_reduction <add>, %125, %cst_60 [1] : vector<1x32xf32> to vector<1xf32>
    %129 = vector.shape_cast %128 : vector<1xf32> to vector<1x1xf32>
    %cst_61 = arith.constant 3.200000e+01 : f32
    %130 = vector.broadcast %cst_61 : f32 to vector<1x1xf32>
    %131 = arith.divf %129, %130 : vector<1x1xf32>
    %132 = vector.broadcast %131 : vector<1x1xf32> to vector<1x32xf32>
    %133 = arith.subf %125, %132 : vector<1x32xf32>
    %134 = arith.mulf %133, %133 : vector<1x32xf32>
    %cst_62 = arith.constant dense<0.000000e+00> : vector<1xf32>
    %135 = vector.multi_reduction <add>, %134, %cst_62 [1] : vector<1x32xf32> to vector<1xf32>
    %136 = vector.shape_cast %135 : vector<1xf32> to vector<1x1xf32>
    %cst_63 = arith.constant 3.200000e+01 : f32
    %137 = vector.broadcast %cst_63 : f32 to vector<1x1xf32>
    %138 = arith.divf %136, %137 : vector<1x1xf32>
    %139 = vector.broadcast %131 : vector<1x1xf32> to vector<1x32xf32>
    %140 = arith.subf %125, %139 : vector<1x32xf32>
    %cst_64 = arith.constant 9.99999974E-6 : f32
    %141 = vector.broadcast %cst_64 : f32 to vector<1x1xf32>
    %142 = arith.addf %138, %141 : vector<1x1xf32>
    %143 = math.rsqrt %142 : vector<1x1xf32>
    %144 = vector.broadcast %143 : vector<1x1xf32> to vector<1x32xf32>
    %145 = arith.mulf %140, %144 : vector<1x32xf32>
    %146 = arith.mulf %145, %126 : vector<1x32xf32>
    %147 = arith.addf %146, %127 : vector<1x32xf32>
    %148 = arith.mulf %147, %147 : vector<1x32xf32>
    %cst_65 = arith.constant dense<0.000000e+00> : vector<1xf32>
    %149 = vector.multi_reduction <add>, %148, %cst_65 [1] : vector<1x32xf32> to vector<1xf32>
    %150 = vector.shape_cast %149 : vector<1xf32> to vector<1x1xf32>
    %cst_66 = arith.constant 1.000000e-24 : f32
    %151 = vector.broadcast %cst_66 : f32 to vector<1x1xf32>
    %152 = arith.maximumf %150, %151 : vector<1x1xf32>
    %153 = math.rsqrt %152 : vector<1x1xf32>
    %154 = vector.broadcast %153 : vector<1x1xf32> to vector<1x32xf32>
    %155 = arith.mulf %147, %154 : vector<1x32xf32>
    %cst_67 = arith.constant 0.000000e+00 : f32
    %156 = vector.broadcast %cst_67 : f32 to vector<1x96xf32>
    %157 = tpu.concatenate %155, %156 in 1 : vector<1x32xf32>, vector<1x96xf32> -> vector<1x128xf32>
    %c0_68 = arith.constant 0 : index
    %c0_69 = arith.constant 0 : index
    %c0_70 = arith.constant 0 : index
    %158 = vector.load %arg25[%c0_68, %c0_69, %c0_70] : memref<1x1x128xf32, #tpu.memory_space<vmem>>, vector<1x1x128xf32>
    %159 = vector.shape_cast %158 : vector<1x1x128xf32> to vector<1x128xf32>
    %160 = vector.shape_cast %157 : vector<1x128xf32> to vector<1x1x128xf32>
    tpu.vector_store %arg25[%c0_68, %c0_69, %c0_70], %160 {strides = array<i32>} : memref<1x1x128xf32, #tpu.memory_space<vmem>>, vector<1x1x128xf32>,
    %c0_71 = arith.constant 0 : index
    %c0_72 = arith.constant 0 : index
    %161 = vector.load %arg17[%c0_71, %c0_72] : memref<32x256xbf16, #tpu.memory_space<vmem>>, vector<32x256xbf16>
    %162 = arith.truncf %155 : vector<1x32xf32> to vector<1x32xbf16>
    %cst_73 = arith.constant dense<0.000000e+00> : vector<1x256xf32>
    %163 = tpu.matmul %162, %161, %cst_73 {dimension_numbers = #tpu.dot_dimension_numbers<[1], [0], [0], [1], [0, 0, 1, 1], [], []>} : vector<1x32xbf16>, vector<32x256xbf16>, vector<1x256xf32> -> vector<1x256xf32>
    %c0_74 = arith.constant 0 : index
    %c0_75 = arith.constant 0 : index
    %164 = vector.load %arg18[%c0_74, %c0_75] : memref<1x256xf32, #tpu.memory_space<vmem>>, vector<1x256xf32>
    %165 = arith.addf %163, %164 : vector<1x256xf32>
    %cst_76 = arith.constant 0.000000e+00 : f32
    %166 = vector.broadcast %cst_76 : f32 to vector<1x256xf32>
    %167 = arith.maximumf %165, %166 : vector<1x256xf32>
    %c0_77 = arith.constant 0 : index
    %c0_78 = arith.constant 0 : index
    %168 = vector.load %arg19[%c0_77, %c0_78] : memref<256x128xbf16, #tpu.memory_space<vmem>>, vector<256x128xbf16>
    %169 = arith.truncf %167 : vector<1x256xf32> to vector<1x256xbf16>
    %cst_79 = arith.constant dense<0.000000e+00> : vector<1x128xf32>
    %170 = tpu.matmul %169, %168, %cst_79 {dimension_numbers = #tpu.dot_dimension_numbers<[1], [0], [0], [1], [0, 0, 1, 1], [], []>} : vector<1x256xbf16>, vector<256x128xbf16>, vector<1x128xf32> -> vector<1x128xf32>
    %c0_80 = arith.constant 0 : index
    %c0_81 = arith.constant 0 : index
    %171 = vector.load %arg20[%c0_80, %c0_81] : memref<1x128xf32, #tpu.memory_space<vmem>>, vector<1x128xf32>
    %172 = arith.addf %170, %171 : vector<1x128xf32>
    %c0_82 = arith.constant 0 : index
    %c0_83 = arith.constant 0 : index
    %c0_84 = arith.constant 0 : index
    %173 = vector.load %arg26[%c0_82, %c0_83, %c0_84] : memref<1x1x128xf32, #tpu.memory_space<vmem>>, vector<1x1x128xf32>
    %174 = vector.shape_cast %173 : vector<1x1x128xf32> to vector<1x128xf32>
    %175 = vector.shape_cast %172 : vector<1x128xf32> to vector<1x1x128xf32>
    tpu.vector_store %arg26[%c0_82, %c0_83, %c0_84], %175 {strides = array<i32>} : memref<1x1x128xf32, #tpu.memory_space<vmem>>, vector<1x1x128xf32>,
    %c0_85 = arith.constant 0 : index
    %c0_86 = arith.constant 0 : index
    %176 = vector.load %arg21[%c0_85, %c0_86] : memref<32x256xbf16, #tpu.memory_space<vmem>>, vector<32x256xbf16>
    %177 = arith.truncf %117 : vector<8x32xf32> to vector<8x32xbf16>
    %cst_87 = arith.constant dense<0.000000e+00> : vector<8x256xf32>
    %178 = tpu.matmul %177, %176, %cst_87 {dimension_numbers = #tpu.dot_dimension_numbers<[1], [0], [0], [1], [0, 0, 1, 1], [], []>} : vector<8x32xbf16>, vector<32x256xbf16>, vector<8x256xf32> -> vector<8x256xf32>
    %c0_88 = arith.constant 0 : index
    %c0_89 = arith.constant 0 : index
    %179 = vector.load %arg22[%c0_88, %c0_89] : memref<1x256xf32, #tpu.memory_space<vmem>>, vector<1x256xf32>
    %180 = vector.broadcast %179 : vector<1x256xf32> to vector<8x256xf32>
    %181 = arith.addf %178, %180 : vector<8x256xf32>
    %cst_90 = arith.constant 0.000000e+00 : f32
    %182 = vector.broadcast %cst_90 : f32 to vector<8x256xf32>
    %183 = arith.maximumf %181, %182 : vector<8x256xf32>
    %c0_91 = arith.constant 0 : index
    %c0_92 = arith.constant 0 : index
    %184 = vector.load %arg23[%c0_91, %c0_92] : memref<256x128xbf16, #tpu.memory_space<vmem>>, vector<256x128xbf16>
    %185 = arith.truncf %183 : vector<8x256xf32> to vector<8x256xbf16>
    %cst_93 = arith.constant dense<0.000000e+00> : vector<8x128xf32>
    %186 = tpu.matmul %185, %184, %cst_93 {dimension_numbers = #tpu.dot_dimension_numbers<[1], [0], [0], [1], [0, 0, 1, 1], [], []>} : vector<8x256xbf16>, vector<256x128xbf16>, vector<8x128xf32> -> vector<8x128xf32>
    %c0_94 = arith.constant 0 : index
    %c0_95 = arith.constant 0 : index
    %187 = vector.load %arg24[%c0_94, %c0_95] : memref<1x128xf32, #tpu.memory_space<vmem>>, vector<1x128xf32>
    %188 = vector.broadcast %187 : vector<1x128xf32> to vector<8x128xf32>
    %189 = arith.addf %186, %188 : vector<8x128xf32>
    %c0_96 = arith.constant 0 : index
    %c0_97 = arith.constant 0 : index
    %c0_98 = arith.constant 0 : index
    %190 = vector.load %arg27[%c0_96, %c0_97, %c0_98] : memref<1x8x128xf32, #tpu.memory_space<vmem>>, vector<1x8x128xf32>
    %191 = vector.shape_cast %190 : vector<1x8x128xf32> to vector<8x128xf32>
    %192 = vector.shape_cast %189 : vector<8x128xf32> to vector<1x8x128xf32>
    tpu.vector_store %arg27[%c0_96, %c0_97, %c0_98], %192 {strides = array<i32>} : memref<1x8x128xf32, #tpu.memory_space<vmem>>, vector<1x8x128xf32>,
    return
  }
  func.func @transform_0(%arg0: i32) -> (i32, i32, i32) {
    %c0_i32 = arith.constant 0 : i32
    %c0_i32_0 = arith.constant 0 : i32
    %c0_i32_1 = arith.constant 0 : i32
    return %arg0, %c0_i32, %c0_i32_0 : i32, i32, i32
  }
  func.func @transform_1(%arg0: i32) -> (i32, i32, i32) {
    %c0_i32 = arith.constant 0 : i32
    %c0_i32_0 = arith.constant 0 : i32
    %c0_i32_1 = arith.constant 0 : i32
    return %arg0, %c0_i32, %c0_i32_0 : i32, i32, i32
  }
  func.func @transform_2(%arg0: i32) -> (i32, i32) {
    %c0_i32 = arith.constant 0 : i32
    %c0_i32_0 = arith.constant 0 : i32
    %c0_i32_1 = arith.constant 0 : i32
    return %c0_i32, %c0_i32_0 : i32, i32
  }
  func.func @transform_3(%arg0: i32) -> (i32, i32) {
    %c0_i32 = arith.constant 0 : i32
    %c0_i32_0 = arith.constant 0 : i32
    %c0_i32_1 = arith.constant 0 : i32
    return %c0_i32, %c0_i32_0 : i32, i32
  }
  func.func @transform_4(%arg0: i32) -> (i32, i32) {
    %c0_i32 = arith.constant 0 : i32
    %c0_i32_0 = arith.constant 0 : i32
    %c0_i32_1 = arith.constant 0 : i32
    return %c0_i32, %c0_i32_0 : i32, i32
  }
  func.func @transform_5(%arg0: i32) -> (i32, i32) {
    %c0_i32 = arith.constant 0 : i32
    %c0_i32_0 = arith.constant 0 : i32
    %c0_i32_1 = arith.constant 0 : i32
    return %c0_i32, %c0_i32_0 : i32, i32
  }
  func.func @transform_6(%arg0: i32) -> (i32, i32) {
    %c0_i32 = arith.constant 0 : i32
    %c0_i32_0 = arith.constant 0 : i32
    %c0_i32_1 = arith.constant 0 : i32
    return %c0_i32, %c0_i32_0 : i32, i32
  }
  func.func @transform_7(%arg0: i32) -> (i32, i32) {
    %c0_i32 = arith.constant 0 : i32
    %c0_i32_0 = arith.constant 0 : i32
    %c0_i32_1 = arith.constant 0 : i32
    return %c0_i32, %c0_i32_0 : i32, i32
  }
  func.func @transform_8(%arg0: i32) -> (i32, i32) {
    %c0_i32 = arith.constant 0 : i32
    %c0_i32_0 = arith.constant 0 : i32
    %c0_i32_1 = arith.constant 0 : i32
    return %c0_i32, %c0_i32_0 : i32, i32
  }
  func.func @transform_9(%arg0: i32) -> (i32, i32) {
    %c0_i32 = arith.constant 0 : i32
    %c0_i32_0 = arith.constant 0 : i32
    %c0_i32_1 = arith.constant 0 : i32
    return %c0_i32, %c0_i32_0 : i32, i32
  }
  func.func @transform_10(%arg0: i32) -> (i32, i32) {
    %c0_i32 = arith.constant 0 : i32
    %c0_i32_0 = arith.constant 0 : i32
    %c0_i32_1 = arith.constant 0 : i32
    return %c0_i32, %c0_i32_0 : i32, i32
  }
  func.func @transform_11(%arg0: i32) -> (i32, i32) {
    %c0_i32 = arith.constant 0 : i32
    %c0_i32_0 = arith.constant 0 : i32
    %c0_i32_1 = arith.constant 0 : i32
    return %c0_i32, %c0_i32_0 : i32, i32
  }
  func.func @transform_12(%arg0: i32) -> (i32, i32) {
    %c0_i32 = arith.constant 0 : i32
    %c0_i32_0 = arith.constant 0 : i32
    %c0_i32_1 = arith.constant 0 : i32
    return %c0_i32, %c0_i32_0 : i32, i32
  }
  func.func @transform_13(%arg0: i32) -> (i32, i32) {
    %c0_i32 = arith.constant 0 : i32
    %c0_i32_0 = arith.constant 0 : i32
    %c0_i32_1 = arith.constant 0 : i32
    return %c0_i32, %c0_i32_0 : i32, i32
  }
  func.func @transform_14(%arg0: i32) -> (i32, i32) {
    %c0_i32 = arith.constant 0 : i32
    %c0_i32_0 = arith.constant 0 : i32
    %c0_i32_1 = arith.constant 0 : i32
    return %c0_i32, %c0_i32_0 : i32, i32
  }
  func.func @transform_15(%arg0: i32) -> (i32, i32) {
    %c0_i32 = arith.constant 0 : i32
    %c0_i32_0 = arith.constant 0 : i32
    %c0_i32_1 = arith.constant 0 : i32
    return %c0_i32, %c0_i32_0 : i32, i32
  }
  func.func @transform_16(%arg0: i32) -> (i32, i32) {
    %c0_i32 = arith.constant 0 : i32
    %c0_i32_0 = arith.constant 0 : i32
    %c0_i32_1 = arith.constant 0 : i32
    return %c0_i32, %c0_i32_0 : i32, i32
  }
  func.func @transform_17(%arg0: i32) -> (i32, i32) {
    %c0_i32 = arith.constant 0 : i32
    %c0_i32_0 = arith.constant 0 : i32
    %c0_i32_1 = arith.constant 0 : i32
    return %c0_i32, %c0_i32_0 : i32, i32
  }
  func.func @transform_18(%arg0: i32) -> (i32, i32) {
    %c0_i32 = arith.constant 0 : i32
    %c0_i32_0 = arith.constant 0 : i32
    %c0_i32_1 = arith.constant 0 : i32
    return %c0_i32, %c0_i32_0 : i32, i32
  }
  func.func @transform_19(%arg0: i32) -> (i32, i32) {
    %c0_i32 = arith.constant 0 : i32
    %c0_i32_0 = arith.constant 0 : i32
    %c0_i32_1 = arith.constant 0 : i32
    return %c0_i32, %c0_i32_0 : i32, i32
  }
  func.func @transform_20(%arg0: i32) -> (i32, i32) {
    %c0_i32 = arith.constant 0 : i32
    %c0_i32_0 = arith.constant 0 : i32
    %c0_i32_1 = arith.constant 0 : i32
    return %c0_i32, %c0_i32_0 : i32, i32
  }
  func.func @transform_21(%arg0: i32) -> (i32, i32) {
    %c0_i32 = arith.constant 0 : i32
    %c0_i32_0 = arith.constant 0 : i32
    %c0_i32_1 = arith.constant 0 : i32
    return %c0_i32, %c0_i32_0 : i32, i32
  }
  func.func @transform_22(%arg0: i32) -> (i32, i32) {
    %c0_i32 = arith.constant 0 : i32
    %c0_i32_0 = arith.constant 0 : i32
    %c0_i32_1 = arith.constant 0 : i32
    return %c0_i32, %c0_i32_0 : i32, i32
  }
  func.func @transform_23(%arg0: i32) -> (i32, i32) {
    %c0_i32 = arith.constant 0 : i32
    %c0_i32_0 = arith.constant 0 : i32
    %c0_i32_1 = arith.constant 0 : i32
    return %c0_i32, %c0_i32_0 : i32, i32
  }
  func.func @transform_24(%arg0: i32) -> (i32, i32, i32) {
    %c0_i32 = arith.constant 0 : i32
    %c0_i32_0 = arith.constant 0 : i32
    %c0_i32_1 = arith.constant 0 : i32
    return %arg0, %c0_i32, %c0_i32_0 : i32, i32, i32
  }
  func.func @transform_25(%arg0: i32) -> (i32, i32, i32) {
    %c0_i32 = arith.constant 0 : i32
    %c0_i32_0 = arith.constant 0 : i32
    %c0_i32_1 = arith.constant 0 : i32
    return %arg0, %c0_i32, %c0_i32_0 : i32, i32, i32
  }
  func.func @transform_26(%arg0: i32) -> (i32, i32, i32) {
    %c0_i32 = arith.constant 0 : i32
    %c0_i32_0 = arith.constant 0 : i32
    %c0_i32_1 = arith.constant 0 : i32
    return %arg0, %c0_i32, %c0_i32_0 : i32, i32, i32
  }
}

</mosaic_0001>

<llo_original>
// kernel: tpu_custom_call.1
$region0: #{tpu_custom_call.1}
  #allocation0 [shape = 'u32[]', space=smem, size = 0x4, offset = 0x4, fixed_abs, tag = 'smem constant byte address 0x4 - core index']
  #allocation1 [shape = 'u32[144,128]{1,0:T(1,128)}', space=vmem, size = 0x12000, scoped, tag = 'internal scratch']
  %s0 = inlined_call_operand.hbm [shape: f32[2,8,32], index: 0, kind: input, shape index: {}]
  %s1 = inlined_call_operand.vmem [shape: f32[2,1,8], index: 1, kind: input, shape index: {}]
  %s2 = inlined_call_operand.hbm [shape: bf16[32,96], index: 2, kind: input, shape index: {}]
  %s3 = inlined_call_operand.vmem [shape: f32[1,96], index: 3, kind: input, shape index: {}]
  %s4 = inlined_call_operand.hbm [shape: bf16[32,32], index: 4, kind: input, shape index: {}]
  %s5 = inlined_call_operand.hbm [shape: f32[1,32], index: 5, kind: input, shape index: {}]
  %s6 = inlined_call_operand.hbm [shape: f32[1,32], index: 6, kind: input, shape index: {}]
  %s7 = inlined_call_operand.hbm [shape: f32[1,32], index: 7, kind: input, shape index: {}]
  %s8 = inlined_call_operand.hbm [shape: bf16[32,64], index: 8, kind: input, shape index: {}]
  %s9 = inlined_call_operand.hbm [shape: f32[1,64], index: 9, kind: input, shape index: {}]
  %s10 = inlined_call_operand.vmem [shape: bf16[64,32], index: 10, kind: input, shape index: {}]
  %s11 = inlined_call_operand.hbm [shape: f32[1,32], index: 11, kind: input, shape index: {}]
  %s12 = inlined_call_operand.hbm [shape: f32[1,32], index: 12, kind: input, shape index: {}]
  %s13 = inlined_call_operand.hbm [shape: f32[1,32], index: 13, kind: input, shape index: {}]
  %s14 = inlined_call_operand.hbm [shape: f32[1,32], index: 14, kind: input, shape index: {}]
  %s15 = inlined_call_operand.hbm [shape: f32[1,32], index: 15, kind: input, shape index: {}]
  %s16 = inlined_call_operand.hbm [shape: bf16[32,256], index: 16, kind: input, shape index: {}]
  %s17 = inlined_call_operand.hbm [shape: f32[1,256], index: 17, kind: input, shape index: {}]
  %s18 = inlined_call_operand.hbm [shape: bf16[256,128], index: 18, kind: input, shape index: {}]
  %s19 = inlined_call_operand.hbm [shape: f32[1,128], index: 19, kind: input, shape index: {}]
  %s20 = inlined_call_operand.hbm [shape: bf16[32,256], index: 20, kind: input, shape index: {}]
  %s21 = inlined_call_operand.hbm [shape: f32[1,256], index: 21, kind: input, shape index: {}]
  %s22 = inlined_call_operand.vmem [shape: bf16[256,128], index: 22, kind: input, shape index: {}]
  %s23 = inlined_call_operand.vmem [shape: f32[1,128], index: 23, kind: input, shape index: {}]
  %s24 = inlined_call_operand.hbm [shape: f32[2,1,128], index: 24, kind: output, shape index: {0}]
  %s25 = inlined_call_operand.hbm [shape: f32[2,1,128], index: 25, kind: output, shape index: {1}]
  %s26 = inlined_call_operand.hbm [shape: f32[2,8,128], index: 26, kind: output, shape index: {2}]
  %27 = xla_tuple %s24, %s25, %s26
  %s28 = sld [smem:[#allocation0]]
  $region221: #{tpu_custom_call.1} parent=0
    _
  %s30 = ssub.s32 1, %s28
  %s31 = scalar_select 0, %s30, %s28
  $region1: #{tpu_custom_call.1} parent=0
    #allocation2 [shape = 'u8[8192]{0}', space=vmem, size = 0x2000, scoped, tag = 'input window, operand 0']
    #allocation3 [shape = 's32[2]{0}', space=sflag, size = 0x8, scoped, tag = 'scoped memory for tpu_custom_call.1']
    #allocation4 [shape = 's32[2]{0}', space=sflag, size = 0x8, scoped, tag = 'scoped memory for tpu_custom_call.1']
    #allocation5 [shape = 'u8[8192]{0}', space=vmem, size = 0x2000, scoped, tag = 'input window, operand 2, single buffered']
    #allocation6 [shape = 's32[1]{0}', space=sflag, size = 0x4, scoped, tag = 'scoped memory for tpu_custom_call.1']
    #allocation7 [shape = 'u8[8192]{0}', space=vmem, size = 0x2000, scoped, tag = 'input window, operand 4, single buffered']
    #allocation8 [shape = 'u8[512]{0}', space=vmem, size = 0x400, scoped, tag = 'input window, operand 5, single buffered']
    #allocation9 [shape = 's32[1]{0}', space=sflag, size = 0x4, scoped, tag = 'scoped memory for tpu_custom_call.1']
    #allocation10 [shape = 'u8[512]{0}', space=vmem, size = 0x400, scoped, tag = 'input window, operand 6, single buffered']
    #allocation11 [shape = 'u8[512]{0}', space=vmem, size = 0x400, scoped, tag = 'input window, operand 7, single buffered']
    #allocation12 [shape = 's32[1]{0}', space=sflag, size = 0x4, scoped, tag = 'scoped memory for tpu_custom_call.1']
    #allocation13 [shape = 'u8[8192]{0}', space=vmem, size = 0x2000, scoped, tag = 'input window, operand 8, single buffered']
    #allocation14 [shape = 'u8[512]{0}', space=vmem, size = 0x400, scoped, tag = 'input window, operand 9, single buffered']
    #allocation15 [shape = 's32[1]{0}', space=sflag, size = 0x4, scoped, tag = 'scoped memory for tpu_custom_call.1']
    #allocation16 [shape = 'u8[512]{0}', space=vmem, size = 0x400, scoped, tag = 'input window, operand 11, single buffered']
    #allocation17 [shape = 'u8[512]{0}', space=vmem, size = 0x400, scoped, tag = 'input window, operand 12, single buffered']
    #allocation18 [shape = 's32[1]{0}', space=sflag, size = 0x4, scoped, tag = 'scoped memory for tpu_custom_call.1']
    #allocation19 [shape = 'u8[512]{0}', space=vmem, size = 0x400, scoped, tag = 'input window, operand 13, single buffered']
    #allocation20 [shape = 'u8[512]{0}', space=vmem, size = 0x400, scoped, tag = 'input window, operand 14, single buffered']
    #allocation21 [shape = 's32[1]{0}', space=sflag, size = 0x4, scoped, tag = 'scoped memory for tpu_custom_call.1']
    #allocation22 [shape = 'u8[512]{0}', space=vmem, size = 0x400, scoped, tag = 'input window, operand 15, single buffered']
    #allocation23 [shape = 'u8[16384]{0}', space=vmem, size = 0x4000, scoped, tag = 'input window, operand 16, single buffered']
    #allocation24 [shape = 's32[1]{0}', space=sflag, size = 0x4, scoped, tag = 'scoped memory for tpu_custom_call.1']
    #allocation25 [shape = 'u8[1024]{0}', space=vmem, size = 0x400, scoped, tag = 'input window, operand 17, single buffered']
    #allocation26 [shape = 'u8[65536]{0}', space=vmem, size = 0x10000, scoped, tag = 'input window, operand 18, single buffered']
    #allocation27 [shape = 's32[1]{0}', space=sflag, size = 0x4, scoped, tag = 'scoped memory for tpu_custom_call.1']
    #allocation28 [shape = 'u8[512]{0}', space=vmem, size = 0x400, scoped, tag = 'input window, operand 19, single buffered']
    #allocation29 [shape = 'u8[16384]{0}', space=vmem, size = 0x4000, scoped, tag = 'input window, operand 20, single buffered']
    #allocation30 [shape = 's32[1]{0}', space=sflag, size = 0x4, scoped, tag = 'scoped memory for tpu_custom_call.1']
    #allocation31 [shape = 'u8[1024]{0}', space=vmem, size = 0x400, scoped, tag = 'input window, operand 21, single buffered']
    #allocation32 [shape = 'u8[1024]{0}', space=vmem, size = 0x400, scoped, tag = 'output window, operand 0']
    #allocation33 [shape = 'u8[1024]{0}', space=vmem, size = 0x400, scoped, tag = 'output window, operand 1']
    #allocation34 [shape = 's32[2]{0}', space=sflag, size = 0x8, scoped, tag = 'scoped memory for tpu_custom_call.1']
    #allocation35 [shape = 'u8[8192]{0}', space=vmem, size = 0x2000, scoped, tag = 'output window, operand 2']
    %32 = vsyncpa [#allocation3], 0
    %s33 = scalar_lea.sflag [#allocation3], 1
    %34 = vsyncpa %s33, 0
    %35 = vsyncpa [#allocation6], 0
    %36 = vsyncpa [#allocation9], 0
    %37 = vsyncpa [#allocation12], 0
    %38 = vsyncpa [#allocation15], 0
    %39 = vsyncpa [#allocation18], 0
    %40 = vsyncpa [#allocation21], 0
    %41 = vsyncpa [#allocation24], 0
    %42 = vsyncpa [#allocation27], 0
    %43 = vsyncpa [#allocation30], 0
    %44 = vsyncpa [#allocation4], 0
    %s45 = scalar_lea.sflag [#allocation4], 1
    %46 = vsyncpa %s45, 0
    %47 = vsyncpa [#allocation34], 0
    %s48 = scalar_lea.sflag [#allocation34], 1
    %49 = vsyncpa %s48, 0
    loop: start=0, step=1, limit=4
    $region2: #{tpu_custom_call.1} parent=1 // loop_pre_header
      _
    $region3: #{tpu_custom_call.1} parent=1 // loop_header
      %s51 = sphi 0, %s55
      %p52 = scmp.ge.s32.totalorder %s51, 4
      %s61 = sphi 0, %s63
      %s64 = sphi 0, %s61
      %s65 = sphi 0, %s64
      %s81 = sphi 0, %s65
      %s87 = sphi 0, %s89
      %s90 = sphi 0, %s87
      %s91 = sphi 0, %s90
      %s107 = sphi 0, %s91
      %s111 = sphi 0, %s111
      %s113 = sphi 0, %s111
      %s114 = sphi 0, %s113
      %s128 = sphi 0, %s114
      %s132 = sphi 0, %s132
      %s134 = sphi 0, %s132
      %s135 = sphi 0, %s134
      %s149 = sphi 0, %s135
      %s153 = sphi 0, %s153
      %s155 = sphi 0, %s153
      %s156 = sphi 0, %s155
      %s170 = sphi 0, %s156
      %s174 = sphi 0, %s174
      %s176 = sphi 0, %s174
      %s177 = sphi 0, %s176
      %s191 = sphi 0, %s177
      %s195 = sphi 0, %s195
      %s197 = sphi 0, %s195
      %s198 = sphi 0, %s197
      %s212 = sphi 0, %s198
      %s216 = sphi 0, %s216
      %s218 = sphi 0, %s216
      %s219 = sphi 0, %s218
      %s233 = sphi 0, %s219
      %s237 = sphi 0, %s237
      %s239 = sphi 0, %s237
      %s240 = sphi 0, %s239
      %s254 = sphi 0, %s240
      %s258 = sphi 0, %s258
      %s260 = sphi 0, %s258
      %s261 = sphi 0, %s260
      %s275 = sphi 0, %s261
      %s279 = sphi 0, %s279
      %s281 = sphi 0, %s279
      %s282 = sphi 0, %s281
      %s296 = sphi 0, %s282
      %s300 = sphi 0, %s300
      %s302 = sphi 0, %s300
      %s303 = sphi 0, %s302
      %s317 = sphi 0, %s303
      %s321 = sphi 0, %s321
      %s323 = sphi 0, %s321
      %s324 = sphi 0, %s323
      %s338 = sphi 0, %s324
      %s342 = sphi 0, %s342
      %s344 = sphi 0, %s342
      %s345 = sphi 0, %s344
      %s359 = sphi 0, %s345
      %s363 = sphi 0, %s363
      %s365 = sphi 0, %s363
      %s366 = sphi 0, %s365
      %s380 = sphi 0, %s366
      %s384 = sphi 0, %s384
      %s386 = sphi 0, %s384
      %s387 = sphi 0, %s386
      %s401 = sphi 0, %s387
      %s405 = sphi 0, %s405
      %s407 = sphi 0, %s405
      %s408 = sphi 0, %s407
      %s422 = sphi 0, %s408
      %s426 = sphi 0, %s426
      %s428 = sphi 0, %s426
      %s429 = sphi 0, %s428
      %s443 = sphi 0, %s429
      %s447 = sphi 0, %s447
      %s449 = sphi 0, %s447
      %s450 = sphi 0, %s449
      %s464 = sphi 0, %s450
      %s468 = sphi 0, %s468
      %s470 = sphi 0, %s468
      %s471 = sphi 0, %s470
      %s485 = sphi 0, %s471
      %s489 = sphi 0, %s489
      %s491 = sphi 0, %s489
      %s492 = sphi 0, %s491
      %s506 = sphi 0, %s492
      %s510 = sphi 0, %s510
      %s512 = sphi 0, %s510
      %s513 = sphi 0, %s512
      %s527 = sphi 0, %s513
      %s531 = sphi 0, %s531
      %s533 = sphi 0, %s531
      %s534 = sphi 0, %s533
      %s548 = sphi 0, %s534
      %s552 = sphi 0, %s552
      %s554 = sphi 0, %s552
      %s555 = sphi 0, %s554
      %s569 = sphi 0, %s555
      %s575 = sphi 0, %s577
      %s578 = sphi 0, %s575
      %s579 = sphi 0, %s578
      %s595 = sphi 0, %s579
      %s601 = sphi 0, %s603
      %s604 = sphi 0, %s601
      %s605 = sphi 0, %s604
      %s621 = sphi 0, %s605
      %s627 = sphi 0, %s629
      %s630 = sphi 0, %s627
      %s631 = sphi 0, %s630
      %s647 = sphi 0, %s631
    $region4: #{tpu_custom_call.1} parent=1 // loop_header_branch
      %54 = sbr.rel (%p52) target = $region8
    $region5: #{tpu_custom_call.1} parent=1 // loop_body
      %s56 = ssub.s32 %s51, 1
      %s57 = ssub.s32 %s51, 2
      %s58 = sadd.s32 %s51, 1
      %s59 = ssub.s32 %s51, %s58
      %p60 = scmp.eq.s32.totalorder %s59, 0
      %s62 = sadd.s32 %s61, 1
      %s63 = scalar_select %p60, %s61, %s62
      %p66 = pneg %p60
      %p67 = scmp.eq.s32.totalorder %s51, 1
      %p68 = por %p66, %p67
      %p69 = scmp.ne.s32.totalorder %s61, %s64
      %p70 = scmp.eq.s32.totalorder %s51, 0
      %p71 = por %p69, %p70
      %p72 = scmp.ne.s32.totalorder %s61, %s64
      %p73 = scmp.eq.s32.totalorder %s56, 1
      %p74 = por %p72, %p73
      %p75 = scmp.ne.s32.totalorder %s64, %s65
      %p76 = scmp.eq.s32.totalorder %s56, 0
      %p77 = por %p75, %p76
      %p78 = scmp.ne.s32.totalorder %s64, %s65
      %p79 = scmp.eq.s32.totalorder %s57, 1
      %p80 = por %p78, %p79
      %p82 = scmp.ne.s32.totalorder %s65, %s81
      %p83 = scmp.eq.s32.totalorder %s57, 0
      %p84 = por %p82, %p83
      %s85 = ssub.s32 %s51, %s58
      %p86 = scmp.eq.s32.totalorder %s85, 0
      %s88 = sadd.s32 %s87, 1
      %s89 = scalar_select %p86, %s87, %s88
      %p92 = pneg %p86
      %p93 = scmp.eq.s32.totalorder %s51, 1
      %p94 = por %p92, %p93
      %p95 = scmp.ne.s32.totalorder %s87, %s90
      %p96 = scmp.eq.s32.totalorder %s51, 0
      %p97 = por %p95, %p96
      %p98 = scmp.ne.s32.totalorder %s87, %s90
      %p99 = scmp.eq.s32.totalorder %s56, 1
      %p100 = por %p98, %p99
      %p101 = scmp.ne.s32.totalorder %s90, %s91
      %p102 = scmp.eq.s32.totalorder %s56, 0
      %p103 = por %p101, %p102
      %p104 = scmp.ne.s32.totalorder %s90, %s91
      %p105 = scmp.eq.s32.totalorder %s57, 1
      %p106 = por %p104, %p105
      %p108 = scmp.ne.s32.totalorder %s91, %s107
      %p109 = scmp.eq.s32.totalorder %s57, 0
      %p110 = por %p108, %p109
      %s112 = sadd.s32 %s111, 1
      %p115 = scmp.eq.s32.totalorder %s51, 1
      %p116 = scmp.ne.s32.totalorder %s111, %s113
      %p117 = scmp.eq.s32.totalorder %s51, 0
      %p118 = por %p116, %p117
      %p119 = scmp.ne.s32.totalorder %s111, %s113
      %p120 = scmp.eq.s32.totalorder %s56, 1
      %p121 = por %p119, %p120
      %p122 = scmp.ne.s32.totalorder %s113, %s114
      %p123 = scmp.eq.s32.totalorder %s56, 0
      %p124 = por %p122, %p123
      %p125 = scmp.ne.s32.totalorder %s113, %s114
      %p126 = scmp.eq.s32.totalorder %s57, 1
      %p127 = por %p125, %p126
      %p129 = scmp.ne.s32.totalorder %s114, %s128
      %p130 = scmp.eq.s32.totalorder %s57, 0
      %p131 = por %p129, %p130
      %s133 = sadd.s32 %s132, 1
      %p136 = scmp.eq.s32.totalorder %s51, 1
      %p137 = scmp.ne.s32.totalorder %s132, %s134
      %p138 = scmp.eq.s32.totalorder %s51, 0
      %p139 = por %p137, %p138
      %p140 = scmp.ne.s32.totalorder %s132, %s134
      %p141 = scmp.eq.s32.totalorder %s56, 1
      %p142 = por %p140, %p141
      %p143 = scmp.ne.s32.totalorder %s134, %s135
      %p144 = scmp.eq.s32.totalorder %s56, 0
      %p145 = por %p143, %p144
      %p146 = scmp.ne.s32.totalorder %s134, %s135
      %p147 = scmp.eq.s32.totalorder %s57, 1
      %p148 = por %p146, %p147
      %p150 = scmp.ne.s32.totalorder %s135, %s149
      %p151 = scmp.eq.s32.totalorder %s57, 0
      %p152 = por %p150, %p151
      %s154 = sadd.s32 %s153, 1
      %p157 = scmp.eq.s32.totalorder %s51, 1
      %p158 = scmp.ne.s32.totalorder %s153, %s155
      %p159 = scmp.eq.s32.totalorder %s51, 0
      %p160 = por %p158, %p159
      %p161 = scmp.ne.s32.totalorder %s153, %s155
      %p162 = scmp.eq.s32.totalorder %s56, 1
      %p163 = por %p161, %p162
      %p164 = scmp.ne.s32.totalorder %s155, %s156
      %p165 = scmp.eq.s32.totalorder %s56, 0
      %p166 = por %p164, %p165
      %p167 = scmp.ne.s32.totalorder %s155, %s156
      %p168 = scmp.eq.s32.totalorder %s57, 1
      %p169 = por %p167, %p168
      %p171 = scmp.ne.s32.totalorder %s156, %s170
      %p172 = scmp.eq.s32.totalorder %s57, 0
      %p173 = por %p171, %p172
      %s175 = sadd.s32 %s174, 1
      %p178 = scmp.eq.s32.totalorder %s51, 1
      %p179 = scmp.ne.s32.totalorder %s174, %s176
      %p180 = scmp.eq.s32.totalorder %s51, 0
      %p181 = por %p179, %p180
      %p182 = scmp.ne.s32.totalorder %s174, %s176
      %p183 = scmp.eq.s32.totalorder %s56, 1
      %p184 = por %p182, %p183
      %p185 = scmp.ne.s32.totalorder %s176, %s177
      %p186 = scmp.eq.s32.totalorder %s56, 0
      %p187 = por %p185, %p186
      %p188 = scmp.ne.s32.totalorder %s176, %s177
      %p189 = scmp.eq.s32.totalorder %s57, 1
      %p190 = por %p188, %p189
      %p192 = scmp.ne.s32.totalorder %s177, %s191
      %p193 = scmp.eq.s32.totalorder %s57, 0
      %p194 = por %p192, %p193
      %s196 = sadd.s32 %s195, 1
      %p199 = scmp.eq.s32.totalorder %s51, 1
      %p200 = scmp.ne.s32.totalorder %s195, %s197
      %p201 = scmp.eq.s32.totalorder %s51, 0
      %p202 = por %p200, %p201
      %p203 = scmp.ne.s32.totalorder %s195, %s197
      %p204 = scmp.eq.s32.totalorder %s56, 1
      %p205 = por %p203, %p204
      %p206 = scmp.ne.s32.totalorder %s197, %s198
      %p207 = scmp.eq.s32.totalorder %s56, 0
      %p208 = por %p206, %p207
      %p209 = scmp.ne.s32.totalorder %s197, %s198
      %p210 = scmp.eq.s32.totalorder %s57, 1
      %p211 = por %p209, %p210
      %p213 = scmp.ne.s32.totalorder %s198, %s212
      %p214 = scmp.eq.s32.totalorder %s57, 0
      %p215 = por %p213, %p214
      %s217 = sadd.s32 %s216, 1
      %p220 = scmp.eq.s32.totalorder %s51, 1
      %p221 = scmp.ne.s32.totalorder %s216, %s218
      %p222 = scmp.eq.s32.totalorder %s51, 0
      %p223 = por %p221, %p222
      %p224 = scmp.ne.s32.totalorder %s216, %s218
      %p225 = scmp.eq.s32.totalorder %s56, 1
      %p226 = por %p224, %p225
      %p227 = scmp.ne.s32.totalorder %s218, %s219
      %p228 = scmp.eq.s32.totalorder %s56, 0
      %p229 = por %p227, %p228
      %p230 = scmp.ne.s32.totalorder %s218, %s219
      %p231 = scmp.eq.s32.totalorder %s57, 1
      %p232 = por %p230, %p231
      %p234 = scmp.ne.s32.totalorder %s219, %s233
      %p235 = scmp.eq.s32.totalorder %s57, 0
      %p236 = por %p234, %p235
      %s238 = sadd.s32 %s237, 1
      %p241 = scmp.eq.s32.totalorder %s51, 1
      %p242 = scmp.ne.s32.totalorder %s237, %s239
      %p243 = scmp.eq.s32.totalorder %s51, 0
      %p244 = por %p242, %p243
      %p245 = scmp.ne.s32.totalorder %s237, %s239
      %p246 = scmp.eq.s32.totalorder %s56, 1
      %p247 = por %p245, %p246
      %p248 = scmp.ne.s32.totalorder %s239, %s240
      %p249 = scmp.eq.s32.totalorder %s56, 0
      %p250 = por %p248, %p249
      %p251 = scmp.ne.s32.totalorder %s239, %s240
      %p252 = scmp.eq.s32.totalorder %s57, 1
      %p253 = por %p251, %p252
      %p255 = scmp.ne.s32.totalorder %s240, %s254
      %p256 = scmp.eq.s32.totalorder %s57, 0
      %p257 = por %p255, %p256
      %s259 = sadd.s32 %s258, 1
      %p262 = scmp.eq.s32.totalorder %s51, 1
      %p263 = scmp.ne.s32.totalorder %s258, %s260
      %p264 = scmp.eq.s32.totalorder %s51, 0
      %p265 = por %p263, %p264
      %p266 = scmp.ne.s32.totalorder %s258, %s260
      %p267 = scmp.eq.s32.totalorder %s56, 1
      %p268 = por %p266, %p267
      %p269 = scmp.ne.s32.totalorder %s260, %s261
      %p270 = scmp.eq.s32.totalorder %s56, 0
      %p271 = por %p269, %p270
      %p272 = scmp.ne.s32.totalorder %s260, %s261
      %p273 = scmp.eq.s32.totalorder %s57, 1
      %p274 = por %p272, %p273
      %p276 = scmp.ne.s32.totalorder %s261, %s275
      %p277 = scmp.eq.s32.totalorder %s57, 0
      %p278 = por %p276, %p277
      %s280 = sadd.s32 %s279, 1
      %p283 = scmp.eq.s32.totalorder %s51, 1
      %p284 = scmp.ne.s32.totalorder %s279, %s281
      %p285 = scmp.eq.s32.totalorder %s51, 0
      %p286 = por %p284, %p285
      %p287 = scmp.ne.s32.totalorder %s279, %s281
      %p288 = scmp.eq.s32.totalorder %s56, 1
      %p289 = por %p287, %p288
      %p290 = scmp.ne.s32.totalorder %s281, %s282
      %p291 = scmp.eq.s32.totalorder %s56, 0
      %p292 = por %p290, %p291
      %p293 = scmp.ne.s32.totalorder %s281, %s282
      %p294 = scmp.eq.s32.totalorder %s57, 1
      %p295 = por %p293, %p294
      %p297 = scmp.ne.s32.totalorder %s282, %s296
      %p298 = scmp.eq.s32.totalorder %s57, 0
      %p299 = por %p297, %p298
      %s301 = sadd.s32 %s300, 1
      %p304 = scmp.eq.s32.totalorder %s51, 1
      %p305 = scmp.ne.s32.totalorder %s300, %s302
      %p306 = scmp.eq.s32.totalorder %s51, 0
      %p307 = por %p305, %p306
      %p308 = scmp.ne.s32.totalorder %s300, %s302
      %p309 = scmp.eq.s32.totalorder %s56, 1
      %p310 = por %p308, %p309
      %p311 = scmp.ne.s32.totalorder %s302, %s303
      %p312 = scmp.eq.s32.totalorder %s56, 0
      %p313 = por %p311, %p312
      %p314 = scmp.ne.s32.totalorder %s302, %s303
      %p315 = scmp.eq.s32.totalorder %s57, 1
      %p316 = por %p314, %p315
      %p318 = scmp.ne.s32.totalorder %s303, %s317
      %p319 = scmp.eq.s32.totalorder %s57, 0
      %p320 = por %p318, %p319
      %s322 = sadd.s32 %s321, 1
      %p325 = scmp.eq.s32.totalorder %s51, 1
      %p326 = scmp.ne.s32.totalorder %s321, %s323
      %p327 = scmp.eq.s32.totalorder %s51, 0
      %p328 = por %p326, %p327
      %p329 = scmp.ne.s32.totalorder %s321, %s323
      %p330 = scmp.eq.s32.totalorder %s56, 1
      %p331 = por %p329, %p330
      %p332 = scmp.ne.s32.totalorder %s323, %s324
      %p333 = scmp.eq.s32.totalorder %s56, 0
      %p334 = por %p332, %p333
      %p335 = scmp.ne.s32.totalorder %s323, %s324
      %p336 = scmp.eq.s32.totalorder %s57, 1
      %p337 = por %p335, %p336
      %p339 = scmp.ne.s32.totalorder %s324, %s338
      %p340 = scmp.eq.s32.totalorder %s57, 0
      %p341 = por %p339, %p340
      %s343 = sadd.s32 %s342, 1
      %p346 = scmp.eq.s32.totalorder %s51, 1
      %p347 = scmp.ne.s32.totalorder %s342, %s344
      %p348 = scmp.eq.s32.totalorder %s51, 0
      %p349 = por %p347, %p348
      %p350 = scmp.ne.s32.totalorder %s342, %s344
      %p351 = scmp.eq.s32.totalorder %s56, 1
      %p352 = por %p350, %p351
      %p353 = scmp.ne.s32.totalorder %s344, %s345
      %p354 = scmp.eq.s32.totalorder %s56, 0
      %p355 = por %p353, %p354
      %p356 = scmp.ne.s32.totalorder %s344, %s345
      %p357 = scmp.eq.s32.totalorder %s57, 1
      %p358 = por %p356, %p357
      %p360 = scmp.ne.s32.totalorder %s345, %s359
      %p361 = scmp.eq.s32.totalorder %s57, 0
      %p362 = por %p360, %p361
      %s364 = sadd.s32 %s363, 1
      %p367 = scmp.eq.s32.totalorder %s51, 1
      %p368 = scmp.ne.s32.totalorder %s363, %s365
      %p369 = scmp.eq.s32.totalorder %s51, 0
      %p370 = por %p368, %p369
      %p371 = scmp.ne.s32.totalorder %s363, %s365
      %p372 = scmp.eq.s32.totalorder %s56, 1
      %p373 = por %p371, %p372
      %p374 = scmp.ne.s32.totalorder %s365, %s366
      %p375 = scmp.eq.s32.totalorder %s56, 0
      %p376 = por %p374, %p375
      %p377 = scmp.ne.s32.totalorder %s365, %s366
      %p378 = scmp.eq.s32.totalorder %s57, 1
      %p379 = por %p377, %p378
      %p381 = scmp.ne.s32.totalorder %s366, %s380
      %p382 = scmp.eq.s32.totalorder %s57, 0
      %p383 = por %p381, %p382
      %s385 = sadd.s32 %s384, 1
      %p388 = scmp.eq.s32.totalorder %s51, 1
      %p389 = scmp.ne.s32.totalorder %s384, %s386
      %p390 = scmp.eq.s32.totalorder %s51, 0
      %p391 = por %p389, %p390
      %p392 = scmp.ne.s32.totalorder %s384, %s386
      %p393 = scmp.eq.s32.totalorder %s56, 1
      %p394 = por %p392, %p393
      %p395 = scmp.ne.s32.totalorder %s386, %s387
      %p396 = scmp.eq.s32.totalorder %s56, 0
      %p397 = por %p395, %p396
      %p398 = scmp.ne.s32.totalorder %s386, %s387
      %p399 = scmp.eq.s32.totalorder %s57, 1
      %p400 = por %p398, %p399
      %p402 = scmp.ne.s32.totalorder %s387, %s401
      %p403 = scmp.eq.s32.totalorder %s57, 0
      %p404 = por %p402, %p403
      %s406 = sadd.s32 %s405, 1
      %p409 = scmp.eq.s32.totalorder %s51, 1
      %p410 = scmp.ne.s32.totalorder %s405, %s407
      %p411 = scmp.eq.s32.totalorder %s51, 0
      %p412 = por %p410, %p411
      %p413 = scmp.ne.s32.totalorder %s405, %s407
      %p414 = scmp.eq.s32.totalorder %s56, 1
      %p415 = por %p413, %p414
      %p416 = scmp.ne.s32.totalorder %s407, %s408
      %p417 = scmp.eq.s32.totalorder %s56, 0
      %p418 = por %p416, %p417
      %p419 = scmp.ne.s32.totalorder %s407, %s408
      %p420 = scmp.eq.s32.totalorder %s57, 1
      %p421 = por %p419, %p420
      %p423 = scmp.ne.s32.totalorder %s408, %s422
      %p424 = scmp.eq.s32.totalorder %s57, 0
      %p425 = por %p423, %p424
      %s427 = sadd.s32 %s426, 1
      %p430 = scmp.eq.s32.totalorder %s51, 1
      %p431 = scmp.ne.s32.totalorder %s426, %s428
      %p432 = scmp.eq.s32.totalorder %s51, 0
      %p433 = por %p431, %p432
      %p434 = scmp.ne.s32.totalorder %s426, %s428
      %p435 = scmp.eq.s32.totalorder %s56, 1
      %p436 = por %p434, %p435
      %p437 = scmp.ne.s32.totalorder %s428, %s429
      %p438 = scmp.eq.s32.totalorder %s56, 0
      %p439 = por %p437, %p438
      %p440 = scmp.ne.s32.totalorder %s428, %s429
      %p441 = scmp.eq.s32.totalorder %s57, 1
      %p442 = por %p440, %p441
      %p444 = scmp.ne.s32.totalorder %s429, %s443
      %p445 = scmp.eq.s32.totalorder %s57, 0
      %p446 = por %p444, %p445
      %s448 = sadd.s32 %s447, 1
      %p451 = scmp.eq.s32.totalorder %s51, 1
      %p452 = scmp.ne.s32.totalorder %s447, %s449
      %p453 = scmp.eq.s32.totalorder %s51, 0
      %p454 = por %p452, %p453
      %p455 = scmp.ne.s32.totalorder %s447, %s449
      %p456 = scmp.eq.s32.totalorder %s56, 1
      %p457 = por %p455, %p456
      %p458 = scmp.ne.s32.totalorder %s449, %s450
      %p459 = scmp.eq.s32.totalorder %s56, 0
      %p460 = por %p458, %p459
      %p461 = scmp.ne.s32.totalorder %s449, %s450
      %p462 = scmp.eq.s32.totalorder %s57, 1
      %p463 = por %p461, %p462
      %p465 = scmp.ne.s32.totalorder %s450, %s464
      %p466 = scmp.eq.s32.totalorder %s57, 0
      %p467 = por %p465, %p466
      %s469 = sadd.s32 %s468, 1
      %p472 = scmp.eq.s32.totalorder %s51, 1
      %p473 = scmp.ne.s32.totalorder %s468, %s470
      %p474 = scmp.eq.s32.totalorder %s51, 0
      %p475 = por %p473, %p474
      %p476 = scmp.ne.s32.totalorder %s468, %s470
      %p477 = scmp.eq.s32.totalorder %s56, 1
      %p478 = por %p476, %p477
      %p479 = scmp.ne.s32.totalorder %s470, %s471
      %p480 = scmp.eq.s32.totalorder %s56, 0
      %p481 = por %p479, %p480
      %p482 = scmp.ne.s32.totalorder %s470, %s471
      %p483 = scmp.eq.s32.totalorder %s57, 1
      %p484 = por %p482, %p483
      %p486 = scmp.ne.s32.totalorder %s471, %s485
      %p487 = scmp.eq.s32.totalorder %s57, 0
      %p488 = por %p486, %p487
      %s490 = sadd.s32 %s489, 1
      %p493 = scmp.eq.s32.totalorder %s51, 1
      %p494 = scmp.ne.s32.totalorder %s489, %s491
      %p495 = scmp.eq.s32.totalorder %s51, 0
      %p496 = por %p494, %p495
      %p497 = scmp.ne.s32.totalorder %s489, %s491
      %p498 = scmp.eq.s32.totalorder %s56, 1
      %p499 = por %p497, %p498
      %p500 = scmp.ne.s32.totalorder %s491, %s492
      %p501 = scmp.eq.s32.totalorder %s56, 0
      %p502 = por %p500, %p501
      %p503 = scmp.ne.s32.totalorder %s491, %s492
      %p504 = scmp.eq.s32.totalorder %s57, 1
      %p505 = por %p503, %p504
      %p507 = scmp.ne.s32.totalorder %s492, %s506
      %p508 = scmp.eq.s32.totalorder %s57, 0
      %p509 = por %p507, %p508
      %s511 = sadd.s32 %s510, 1
      %p514 = scmp.eq.s32.totalorder %s51, 1
      %p515 = scmp.ne.s32.totalorder %s510, %s512
      %p516 = scmp.eq.s32.totalorder %s51, 0
      %p517 = por %p515, %p516
      %p518 = scmp.ne.s32.totalorder %s510, %s512
      %p519 = scmp.eq.s32.totalorder %s56, 1
      %p520 = por %p518, %p519
      %p521 = scmp.ne.s32.totalorder %s512, %s513
      %p522 = scmp.eq.s32.totalorder %s56, 0
      %p523 = por %p521, %p522
      %p524 = scmp.ne.s32.totalorder %s512, %s513
      %p525 = scmp.eq.s32.totalorder %s57, 1
      %p526 = por %p524, %p525
      %p528 = scmp.ne.s32.totalorder %s513, %s527
      %p529 = scmp.eq.s32.totalorder %s57, 0
      %p530 = por %p528, %p529
      %s532 = sadd.s32 %s531, 1
      %p535 = scmp.eq.s32.totalorder %s51, 1
      %p536 = scmp.ne.s32.totalorder %s531, %s533
      %p537 = scmp.eq.s32.totalorder %s51, 0
      %p538 = por %p536, %p537
      %p539 = scmp.ne.s32.totalorder %s531, %s533
      %p540 = scmp.eq.s32.totalorder %s56, 1
      %p541 = por %p539, %p540
      %p542 = scmp.ne.s32.totalorder %s533, %s534
      %p543 = scmp.eq.s32.totalorder %s56, 0
      %p544 = por %p542, %p543
      %p545 = scmp.ne.s32.totalorder %s533, %s534
      %p546 = scmp.eq.s32.totalorder %s57, 1
      %p547 = por %p545, %p546
      %p549 = scmp.ne.s32.totalorder %s534, %s548
      %p550 = scmp.eq.s32.totalorder %s57, 0
      %p551 = por %p549, %p550
      %s553 = sadd.s32 %s552, 1
      %p556 = scmp.eq.s32.totalorder %s51, 1
      %p557 = scmp.ne.s32.totalorder %s552, %s554
      %p558 = scmp.eq.s32.totalorder %s51, 0
      %p559 = por %p557, %p558
      %p560 = scmp.ne.s32.totalorder %s552, %s554
      %p561 = scmp.eq.s32.totalorder %s56, 1
      %p562 = por %p560, %p561
      %p563 = scmp.ne.s32.totalorder %s554, %s555
      %p564 = scmp.eq.s32.totalorder %s56, 0
      %p565 = por %p563, %p564
      %p566 = scmp.ne.s32.totalorder %s554, %s555
      %p567 = scmp.eq.s32.totalorder %s57, 1
      %p568 = por %p566, %p567
      %p570 = scmp.ne.s32.totalorder %s555, %s569
      %p571 = scmp.eq.s32.totalorder %s57, 0
      %p572 = por %p570, %p571
      %s573 = ssub.s32 %s51, %s58
      %p574 = scmp.eq.s32.totalorder %s573, 0
      %s576 = sadd.s32 %s575, 1
      %s577 = scalar_select %p574, %s575, %s576
      %p580 = pneg %p574
      %p581 = scmp.eq.s32.totalorder %s51, 1
      %p582 = por %p580, %p581
      %p583 = scmp.ne.s32.totalorder %s575, %s578
      %p584 = scmp.eq.s32.totalorder %s51, 0
      %p585 = por %p583, %p584
      %p586 = scmp.ne.s32.totalorder %s575, %s578
      %p587 = scmp.eq.s32.totalorder %s56, 1
      %p588 = por %p586, %p587
      %p589 = scmp.ne.s32.totalorder %s578, %s579
      %p590 = scmp.eq.s32.totalorder %s56, 0
      %p591 = por %p589, %p590
      %p592 = scmp.ne.s32.totalorder %s578, %s579
      %p593 = scmp.eq.s32.totalorder %s57, 1
      %p594 = por %p592, %p593
      %p596 = scmp.ne.s32.totalorder %s579, %s595
      %p597 = scmp.eq.s32.totalorder %s57, 0
      %p598 = por %p596, %p597
      %s599 = ssub.s32 %s51, %s58
      %p600 = scmp.eq.s32.totalorder %s599, 0
      %s602 = sadd.s32 %s601, 1
      %s603 = scalar_select %p600, %s601, %s602
      %p606 = pneg %p600
      %p607 = scmp.eq.s32.totalorder %s51, 1
      %p608 = por %p606, %p607
      %p609 = scmp.ne.s32.totalorder %s601, %s604
      %p610 = scmp.eq.s32.totalorder %s51, 0
      %p611 = por %p609, %p610
      %p612 = scmp.ne.s32.totalorder %s601, %s604
      %p613 = scmp.eq.s32.totalorder %s56, 1
      %p614 = por %p612, %p613
      %p615 = scmp.ne.s32.totalorder %s604, %s605
      %p616 = scmp.eq.s32.totalorder %s56, 0
      %p617 = por %p615, %p616
      %p618 = scmp.ne.s32.totalorder %s604, %s605
      %p619 = scmp.eq.s32.totalorder %s57, 1
      %p620 = por %p618, %p619
      %p622 = scmp.ne.s32.totalorder %s605, %s621
      %p623 = scmp.eq.s32.totalorder %s57, 0
      %p624 = por %p622, %p623
      %s625 = ssub.s32 %s51, %s58
      %p626 = scmp.eq.s32.totalorder %s625, 0
      %s628 = sadd.s32 %s627, 1
      %s629 = scalar_select %p626, %s627, %s628
      %p632 = pneg %p626
      %p633 = scmp.eq.s32.totalorder %s51, 1
      %p634 = por %p632, %p633
      %p635 = scmp.ne.s32.totalorder %s627, %s630
      %p636 = scmp.eq.s32.totalorder %s51, 0
      %p637 = por %p635, %p636
      %p638 = scmp.ne.s32.totalorder %s627, %s630
      %p639 = scmp.eq.s32.totalorder %s56, 1
      %p640 = por %p638, %p639
      %p641 = scmp.ne.s32.totalorder %s630, %s631
      %p642 = scmp.eq.s32.totalorder %s56, 0
      %p643 = por %p641, %p642
      %p644 = scmp.ne.s32.totalorder %s630, %s631
      %p645 = scmp.eq.s32.totalorder %s57, 1
      %p646 = por %p644, %p645
      %p648 = scmp.ne.s32.totalorder %s631, %s647
      %p649 = scmp.eq.s32.totalorder %s57, 0
      %p650 = por %p648, %p649
      %p651 = scmp.le.s32.totalorder 1, %s51
      %p652 = scmp.lt.s32.totalorder %s51, 3
      %p653 = pnand %p651, %p652
      %p654 = pneg %p653
      // Predicated region
      $region9: #{tpu_custom_call.1} parent=5 // pred_check
        _
      $region10: #{tpu_custom_call.1} parent=5 // pred_check_branch
        %656 = sbr.rel (%p653) target = $region12
      $region11: #{tpu_custom_call.1} parent=5 // pred_region
        %s657 = ssub.s32 %s51, 1
        // Predicated region
        $region13: #{tpu_custom_call.1} parent=11 // pred_check
          %p658 = pneg %p124
        $region14: #{tpu_custom_call.1} parent=11 // pred_check_branch
          %660 = sbr.rel (%p658) target = $region16
        $region15: #{tpu_custom_call.1} parent=11 // pred_region
          %s662 = ssub.s32 256, 256
          %663 = vsyncadd [#allocation6], %s662
          %s664 = sshll.u32 [#allocation5], 4
          %s665 = int_to_ptr.vmem [resolvable:$true] %s664
          %670 = dma.hbm_to_vmem [thread:$0]  %s2, 256, %s665, [#allocation6], 64, 64, 4
        $region16: #{tpu_custom_call.1} parent=11 // pred_fallthru
          _
        // Predicated region
        $region17: #{tpu_custom_call.1} parent=11 // pred_check
          %p671 = pneg %p145
        $region18: #{tpu_custom_call.1} parent=11 // pred_check_branch
          %673 = sbr.rel (%p671) target = $region20
        $region19: #{tpu_custom_call.1} parent=11 // pred_region
          _
        $region20: #{tpu_custom_call.1} parent=11 // pred_fallthru
          _
        // Predicated region
        $region21: #{tpu_custom_call.1} parent=11 // pred_check
          %p674 = pneg %p166
        $region22: #{tpu_custom_call.1} parent=11 // pred_check_branch
          %676 = sbr.rel (%p674) target = $region24
        $region23: #{tpu_custom_call.1} parent=11 // pred_region
          %s678 = ssub.s32 256, 256
          %679 = vsyncadd [#allocation6], %s678
          %s680 = sshll.u32 [#allocation7], 4
          %s681 = int_to_ptr.vmem [resolvable:$true] %s680
          %686 = dma.hbm_to_vmem [thread:$0]  %s4, 256, %s681, [#allocation6], 64, 64, 4
        $region24: #{tpu_custom_call.1} parent=11 // pred_fallthru
          _
        // Predicated region
        $region25: #{tpu_custom_call.1} parent=11 // pred_check
          %p687 = pneg %p187
        $region26: #{tpu_custom_call.1} parent=11 // pred_check_branch
          %689 = sbr.rel (%p687) target = $region28
        $region27: #{tpu_custom_call.1} parent=11 // pred_region
          %s691 = ssub.s32 16, 16
          %692 = vsyncadd [#allocation9], %s691
          %s694 = sshll.u32 [#allocation8], 4
          %s695 = int_to_ptr.vmem [resolvable:$true] %s694
          %697 = dma.hbm_to_vmem [thread:$0]  %s5, 16, %s695, [#allocation9]
        $region28: #{tpu_custom_call.1} parent=11 // pred_fallthru
          _
        // Predicated region
        $region29: #{tpu_custom_call.1} parent=11 // pred_check
          %p698 = pneg %p208
        $region30: #{tpu_custom_call.1} parent=11 // pred_check_branch
          %700 = sbr.rel (%p698) target = $region32
        $region31: #{tpu_custom_call.1} parent=11 // pred_region
          %s702 = ssub.s32 16, 16
          %703 = vsyncadd [#allocation9], %s702
          %s705 = sshll.u32 [#allocation10], 4
          %s706 = int_to_ptr.vmem [resolvable:$true] %s705
          %708 = dma.hbm_to_vmem [thread:$0]  %s6, 16, %s706, [#allocation9]
        $region32: #{tpu_custom_call.1} parent=11 // pred_fallthru
          _
        // Predicated region
        $region33: #{tpu_custom_call.1} parent=11 // pred_check
          %p709 = pneg %p229
        $region34: #{tpu_custom_call.1} parent=11 // pred_check_branch
          %711 = sbr.rel (%p709) target = $region36
        $region35: #{tpu_custom_call.1} parent=11 // pred_region
          %s713 = ssub.s32 16, 16
          %714 = vsyncadd [#allocation12], %s713
          %s716 = sshll.u32 [#allocation11], 4
          %s717 = int_to_ptr.vmem [resolvable:$true] %s716
          %719 = dma.hbm_to_vmem [thread:$0]  %s7, 16, %s717, [#allocation12]
        $region36: #{tpu_custom_call.1} parent=11 // pred_fallthru
          _
        // Predicated region
        $region37: #{tpu_custom_call.1} parent=11 // pred_check
          %p720 = pneg %p250
        $region38: #{tpu_custom_call.1} parent=11 // pred_check_branch
          %722 = sbr.rel (%p720) target = $region40
        $region39: #{tpu_custom_call.1} parent=11 // pred_region
          %s724 = ssub.s32 256, 256
          %725 = vsyncadd [#allocation12], %s724
          %s726 = sshll.u32 [#allocation13], 4
          %s727 = int_to_ptr.vmem [resolvable:$true] %s726
          %732 = dma.hbm_to_vmem [thread:$0]  %s8, 256, %s727, [#allocation12], 64, 64, 4
        $region40: #{tpu_custom_call.1} parent=11 // pred_fallthru
          _
        // Predicated region
        $region41: #{tpu_custom_call.1} parent=11 // pred_check
          %p733 = pneg %p271
        $region42: #{tpu_custom_call.1} parent=11 // pred_check_branch
          %735 = sbr.rel (%p733) target = $region44
        $region43: #{tpu_custom_call.1} parent=11 // pred_region
          %s737 = ssub.s32 16, 16
          %738 = vsyncadd [#allocation15], %s737
          %s740 = sshll.u32 [#allocation14], 4
          %s741 = int_to_ptr.vmem [resolvable:$true] %s740
          %743 = dma.hbm_to_vmem [thread:$0]  %s9, 16, %s741, [#allocation15]
        $region44: #{tpu_custom_call.1} parent=11 // pred_fallthru
          _
        // Predicated region
        $region45: #{tpu_custom_call.1} parent=11 // pred_check
          %p744 = pneg %p292
        $region46: #{tpu_custom_call.1} parent=11 // pred_check_branch
          %746 = sbr.rel (%p744) target = $region48
        $region47: #{tpu_custom_call.1} parent=11 // pred_region
          _
        $region48: #{tpu_custom_call.1} parent=11 // pred_fallthru
          _
        // Predicated region
        $region49: #{tpu_custom_call.1} parent=11 // pred_check
          %p747 = pneg %p313
        $region50: #{tpu_custom_call.1} parent=11 // pred_check_branch
          %749 = sbr.rel (%p747) target = $region52
        $region51: #{tpu_custom_call.1} parent=11 // pred_region
          %s751 = ssub.s32 16, 16
          %752 = vsyncadd [#allocation15], %s751
          %s754 = sshll.u32 [#allocation16], 4
          %s755 = int_to_ptr.vmem [resolvable:$true] %s754
          %757 = dma.hbm_to_vmem [thread:$0]  %s11, 16, %s755, [#allocation15]
        $region52: #{tpu_custom_call.1} parent=11 // pred_fallthru
          _
        // Predicated region
        $region53: #{tpu_custom_call.1} parent=11 // pred_check
          %p758 = pneg %p334
        $region54: #{tpu_custom_call.1} parent=11 // pred_check_branch
          %760 = sbr.rel (%p758) target = $region56
        $region55: #{tpu_custom_call.1} parent=11 // pred_region
          %s762 = ssub.s32 16, 16
          %763 = vsyncadd [#allocation18], %s762
          %s765 = sshll.u32 [#allocation17], 4
          %s766 = int_to_ptr.vmem [resolvable:$true] %s765
          %768 = dma.hbm_to_vmem [thread:$0]  %s12, 16, %s766, [#allocation18]
        $region56: #{tpu_custom_call.1} parent=11 // pred_fallthru
          _
        // Predicated region
        $region57: #{tpu_custom_call.1} parent=11 // pred_check
          %p769 = pneg %p355
        $region58: #{tpu_custom_call.1} parent=11 // pred_check_branch
          %771 = sbr.rel (%p769) target = $region60
        $region59: #{tpu_custom_call.1} parent=11 // pred_region
          %s773 = ssub.s32 16, 16
          %774 = vsyncadd [#allocation18], %s773
          %s776 = sshll.u32 [#allocation19], 4
          %s777 = int_to_ptr.vmem [resolvable:$true] %s776
          %779 = dma.hbm_to_vmem [thread:$0]  %s13, 16, %s777, [#allocation18]
        $region60: #{tpu_custom_call.1} parent=11 // pred_fallthru
          _
        // Predicated region
        $region61: #{tpu_custom_call.1} parent=11 // pred_check
          %p780 = pneg %p376
        $region62: #{tpu_custom_call.1} parent=11 // pred_check_branch
          %782 = sbr.rel (%p780) target = $region64
        $region63: #{tpu_custom_call.1} parent=11 // pred_region
          %s784 = ssub.s32 16, 16
          %785 = vsyncadd [#allocation21], %s784
          %s787 = sshll.u32 [#allocation20], 4
          %s788 = int_to_ptr.vmem [resolvable:$true] %s787
          %790 = dma.hbm_to_vmem [thread:$0]  %s14, 16, %s788, [#allocation21]
        $region64: #{tpu_custom_call.1} parent=11 // pred_fallthru
          _
        // Predicated region
        $region65: #{tpu_custom_call.1} parent=11 // pred_check
          %p791 = pneg %p397
        $region66: #{tpu_custom_call.1} parent=11 // pred_check_branch
          %793 = sbr.rel (%p791) target = $region68
        $region67: #{tpu_custom_call.1} parent=11 // pred_region
          %s795 = ssub.s32 16, 16
          %796 = vsyncadd [#allocation21], %s795
          %s798 = sshll.u32 [#allocation22], 4
          %s799 = int_to_ptr.vmem [resolvable:$true] %s798
          %801 = dma.hbm_to_vmem [thread:$0]  %s15, 16, %s799, [#allocation21]
        $region68: #{tpu_custom_call.1} parent=11 // pred_fallthru
          _
        // Predicated region
        $region69: #{tpu_custom_call.1} parent=11 // pred_check
          %p802 = pneg %p418
        $region70: #{tpu_custom_call.1} parent=11 // pred_check_branch
          %804 = sbr.rel (%p802) target = $region72
        $region71: #{tpu_custom_call.1} parent=11 // pred_region
          %s806 = ssub.s32 512, 512
          %807 = vsyncadd [#allocation24], %s806
          %s808 = sshll.u32 [#allocation23], 4
          %s809 = int_to_ptr.vmem [resolvable:$true] %s808
          %814 = dma.hbm_to_vmem [thread:$0]  %s16, 512, %s809, [#allocation24], 128, 128, 8
        $region72: #{tpu_custom_call.1} parent=11 // pred_fallthru
          _
        // Predicated region
        $region73: #{tpu_custom_call.1} parent=11 // pred_check
          %p815 = pneg %p439
        $region74: #{tpu_custom_call.1} parent=11 // pred_check_branch
          %817 = sbr.rel (%p815) target = $region76
        $region75: #{tpu_custom_call.1} parent=11 // pred_region
          %s819 = ssub.s32 32, 32
          %820 = vsyncadd [#allocation24], %s819
          %s822 = sshll.u32 [#allocation25], 4
          %s823 = int_to_ptr.vmem [resolvable:$true] %s822
          %825 = dma.hbm_to_vmem [thread:$0]  %s17, 32, %s823, [#allocation24]
        $region76: #{tpu_custom_call.1} parent=11 // pred_fallthru
          _
        // Predicated region
        $region77: #{tpu_custom_call.1} parent=11 // pred_check
          %p826 = pneg %p460
        $region78: #{tpu_custom_call.1} parent=11 // pred_check_branch
          %828 = sbr.rel (%p826) target = $region80
        $region79: #{tpu_custom_call.1} parent=11 // pred_region
          %s830 = ssub.s32 2048, 2048
          %831 = vsyncadd [#allocation27], %s830
          %s832 = sshll.u32 [#allocation26], 4
          %s833 = int_to_ptr.vmem [resolvable:$true] %s832
          %838 = dma.hbm_to_vmem [thread:$0]  %s18, 2048, %s833, [#allocation27], 64, 64, 4
        $region80: #{tpu_custom_call.1} parent=11 // pred_fallthru
          _
        // Predicated region
        $region81: #{tpu_custom_call.1} parent=11 // pred_check
          %p839 = pneg %p481
        $region82: #{tpu_custom_call.1} parent=11 // pred_check_branch
          %841 = sbr.rel (%p839) target = $region84
        $region83: #{tpu_custom_call.1} parent=11 // pred_region
          %s843 = ssub.s32 16, 16
          %844 = vsyncadd [#allocation27], %s843
          %s846 = sshll.u32 [#allocation28], 4
          %s847 = int_to_ptr.vmem [resolvable:$true] %s846
          %849 = dma.hbm_to_vmem [thread:$0]  %s19, 16, %s847, [#allocation27]
        $region84: #{tpu_custom_call.1} parent=11 // pred_fallthru
          _
        // Predicated region
        $region85: #{tpu_custom_call.1} parent=11 // pred_check
          %p850 = pneg %p502
        $region86: #{tpu_custom_call.1} parent=11 // pred_check_branch
          %852 = sbr.rel (%p850) target = $region88
        $region87: #{tpu_custom_call.1} parent=11 // pred_region
          %s854 = ssub.s32 512, 512
          %855 = vsyncadd [#allocation30], %s854
          %s856 = sshll.u32 [#allocation29], 4
          %s857 = int_to_ptr.vmem [resolvable:$true] %s856
          %862 = dma.hbm_to_vmem [thread:$0]  %s20, 512, %s857, [#allocation30], 128, 128, 8
        $region88: #{tpu_custom_call.1} parent=11 // pred_fallthru
          _
        // Predicated region
        $region89: #{tpu_custom_call.1} parent=11 // pred_check
          %p863 = pneg %p523
        $region90: #{tpu_custom_call.1} parent=11 // pred_check_branch
          %865 = sbr.rel (%p863) target = $region92
        $region91: #{tpu_custom_call.1} parent=11 // pred_region
          %s867 = ssub.s32 32, 32
          %868 = vsyncadd [#allocation30], %s867
          %s870 = sshll.u32 [#allocation31], 4
          %s871 = int_to_ptr.vmem [resolvable:$true] %s870
          %873 = dma.hbm_to_vmem [thread:$0]  %s21, 32, %s871, [#allocation30]
        $region92: #{tpu_custom_call.1} parent=11 // pred_fallthru
          _
        // Predicated region
        $region93: #{tpu_custom_call.1} parent=11 // pred_check
          %p874 = pneg %p544
        $region94: #{tpu_custom_call.1} parent=11 // pred_check_branch
          %876 = sbr.rel (%p874) target = $region96
        $region95: #{tpu_custom_call.1} parent=11 // pred_region
          _
        $region96: #{tpu_custom_call.1} parent=11 // pred_fallthru
          _
        // Predicated region
        $region97: #{tpu_custom_call.1} parent=11 // pred_check
          %p877 = pneg %p565
        $region98: #{tpu_custom_call.1} parent=11 // pred_check_branch
          %879 = sbr.rel (%p877) target = $region100
        $region99: #{tpu_custom_call.1} parent=11 // pred_region
          _
        $region100: #{tpu_custom_call.1} parent=11 // pred_fallthru
          _
      $region12: #{tpu_custom_call.1} parent=5 // pred_fallthru
        _
      %p880 = scmp.lt.s32.totalorder %s51, 2
      // Predicated region
      $region101: #{tpu_custom_call.1} parent=5 // pred_check
        %p881 = pneg %p880
      $region102: #{tpu_custom_call.1} parent=5 // pred_check_branch
        %883 = sbr.rel (%p881) target = $region104
      $region103: #{tpu_custom_call.1} parent=5 // pred_region
        // Predicated region
        $region105: #{tpu_custom_call.1} parent=103 // pred_check
          %p884 = pneg %p71
        $region106: #{tpu_custom_call.1} parent=103 // pred_check_branch
          %886 = sbr.rel (%p884) target = $region108
        $region107: #{tpu_custom_call.1} parent=103 // pred_region
          %s887 = sand.u32 %s61, 1
          %s888 = scalar_lea.sflag [#allocation3], %s887
          %s889 = sand.u32 %s61, 1
          %s890 = smul.addr %s889, 8
          %s891 = scalar_lea.vmem [#allocation2], %s890
          %s893 = ssub.s32 128, 128
          %894 = vsyncadd %s888, %s893
          %s895 = smul.addr %s51, 128
          %s896 = scalar_lea.hbm %s0, %s895
          %s898 = sshll.u32 %s891, 4
          %s899 = int_to_ptr.vmem [resolvable:$true] %s898
          %901 = dma.hbm_to_vmem [thread:$0]  %s896, 128, %s899, %s888
        $region108: #{tpu_custom_call.1} parent=103 // pred_fallthru
          _
        // Predicated region
        $region109: #{tpu_custom_call.1} parent=103 // pred_check
          %p902 = pneg %p97
        $region110: #{tpu_custom_call.1} parent=103 // pred_check_branch
          %904 = sbr.rel (%p902) target = $region112
        $region111: #{tpu_custom_call.1} parent=103 // pred_region
          %p905 = scmp.lt.s32.totalorder %s51, 1
          %s906 = scalar_select %p905, %s51, 1
          %s907 = scalar_lea.vmem %s1, %s906
        $region112: #{tpu_custom_call.1} parent=103 // pred_fallthru
          _
      $region104: #{tpu_custom_call.1} parent=5 // pred_fallthru
        _
      %p908 = scmp.le.s32.totalorder 1, %s51
      %p909 = scmp.lt.s32.totalorder %s51, 3
      %p910 = pnand %p908, %p909
      %p911 = pneg %p910
      // Predicated region
      $region113: #{tpu_custom_call.1} parent=5 // pred_check
        _
      $region114: #{tpu_custom_call.1} parent=5 // pred_check_branch
        %913 = sbr.rel (%p910) target = $region116
      $region115: #{tpu_custom_call.1} parent=5 // pred_region
        %s914 = ssub.s32 %s51, 1
        %s915 = sand.u32 %s64, 1
        %s916 = scalar_lea.sflag [#allocation3], %s915
        %s917 = sand.u32 %s64, 1
        %s918 = smul.addr %s917, 8
        %s919 = scalar_lea.vmem [#allocation2], %s918
        // Predicated region
        $region117: #{tpu_custom_call.1} parent=115 // pred_check
          %p920 = pneg %p77
        $region118: #{tpu_custom_call.1} parent=115 // pred_check_branch
          %922 = sbr.rel (%p920) target = $region120
        $region119: #{tpu_custom_call.1} parent=115 // pred_region
          %923 = dma.done %s916, 128
        $region120: #{tpu_custom_call.1} parent=115 // pred_fallthru
          _
        // Predicated region
        $region121: #{tpu_custom_call.1} parent=115 // pred_check
          %p924 = pneg %p124
        $region122: #{tpu_custom_call.1} parent=115 // pred_check_branch
          %926 = sbr.rel (%p924) target = $region124
        $region123: #{tpu_custom_call.1} parent=115 // pred_region
          %927 = dma.done [#allocation6], 256
        $region124: #{tpu_custom_call.1} parent=115 // pred_fallthru
          _
        // Predicated region
        $region125: #{tpu_custom_call.1} parent=115 // pred_check
          %p928 = pneg %p166
        $region126: #{tpu_custom_call.1} parent=115 // pred_check_branch
          %930 = sbr.rel (%p928) target = $region128
        $region127: #{tpu_custom_call.1} parent=115 // pred_region
          %931 = dma.done [#allocation6], 256
        $region128: #{tpu_custom_call.1} parent=115 // pred_fallthru
          _
        // Predicated region
        $region129: #{tpu_custom_call.1} parent=115 // pred_check
          %p932 = pneg %p187
        $region130: #{tpu_custom_call.1} parent=115 // pred_check_branch
          %934 = sbr.rel (%p932) target = $region132
        $region131: #{tpu_custom_call.1} parent=115 // pred_region
          %935 = dma.done [#allocation9], 16
        $region132: #{tpu_custom_call.1} parent=115 // pred_fallthru
          _
        // Predicated region
        $region133: #{tpu_custom_call.1} parent=115 // pred_check
          %p936 = pneg %p208
        $region134: #{tpu_custom_call.1} parent=115 // pred_check_branch
          %938 = sbr.rel (%p936) target = $region136
        $region135: #{tpu_custom_call.1} parent=115 // pred_region
          %939 = dma.done [#allocation9], 16
        $region136: #{tpu_custom_call.1} parent=115 // pred_fallthru
          _
        // Predicated region
        $region137: #{tpu_custom_call.1} parent=115 // pred_check
          %p940 = pneg %p229
        $region138: #{tpu_custom_call.1} parent=115 // pred_check_branch
          %942 = sbr.rel (%p940) target = $region140
        $region139: #{tpu_custom_call.1} parent=115 // pred_region
          %943 = dma.done [#allocation12], 16
        $region140: #{tpu_custom_call.1} parent=115 // pred_fallthru
          _
        // Predicated region
        $region141: #{tpu_custom_call.1} parent=115 // pred_check
          %p944 = pneg %p250
        $region142: #{tpu_custom_call.1} parent=115 // pred_check_branch
          %946 = sbr.rel (%p944) target = $region144
        $region143: #{tpu_custom_call.1} parent=115 // pred_region
          %947 = dma.done [#allocation12], 256
        $region144: #{tpu_custom_call.1} parent=115 // pred_fallthru
          _
        // Predicated region
        $region145: #{tpu_custom_call.1} parent=115 // pred_check
          %p948 = pneg %p271
        $region146: #{tpu_custom_call.1} parent=115 // pred_check_branch
          %950 = sbr.rel (%p948) target = $region148
        $region147: #{tpu_custom_call.1} parent=115 // pred_region
          %951 = dma.done [#allocation15], 16
        $region148: #{tpu_custom_call.1} parent=115 // pred_fallthru
          _
        // Predicated region
        $region149: #{tpu_custom_call.1} parent=115 // pred_check
          %p952 = pneg %p313
        $region150: #{tpu_custom_call.1} parent=115 // pred_check_branch
          %954 = sbr.rel (%p952) target = $region152
        $region151: #{tpu_custom_call.1} parent=115 // pred_region
          %955 = dma.done [#allocation15], 16
        $region152: #{tpu_custom_call.1} parent=115 // pred_fallthru
          _
        // Predicated region
        $region153: #{tpu_custom_call.1} parent=115 // pred_check
          %p956 = pneg %p334
        $region154: #{tpu_custom_call.1} parent=115 // pred_check_branch
          %958 = sbr.rel (%p956) target = $region156
        $region155: #{tpu_custom_call.1} parent=115 // pred_region
          %959 = dma.done [#allocation18], 16
        $region156: #{tpu_custom_call.1} parent=115 // pred_fallthru
          _
        // Predicated region
        $region157: #{tpu_custom_call.1} parent=115 // pred_check
          %p960 = pneg %p355
        $region158: #{tpu_custom_call.1} parent=115 // pred_check_branch
          %962 = sbr.rel (%p960) target = $region160
        $region159: #{tpu_custom_call.1} parent=115 // pred_region
          %963 = dma.done [#allocation18], 16
        $region160: #{tpu_custom_call.1} parent=115 // pred_fallthru
          _
        // Predicated region
        $region161: #{tpu_custom_call.1} parent=115 // pred_check
          %p964 = pneg %p376
        $region162: #{tpu_custom_call.1} parent=115 // pred_check_branch
          %966 = sbr.rel (%p964) target = $region164
        $region163: #{tpu_custom_call.1} parent=115 // pred_region
          %967 = dma.done [#allocation21], 16
        $region164: #{tpu_custom_call.1} parent=115 // pred_fallthru
          _
        // Predicated region
        $region165: #{tpu_custom_call.1} parent=115 // pred_check
          %p968 = pneg %p397
        $region166: #{tpu_custom_call.1} parent=115 // pred_check_branch
          %970 = sbr.rel (%p968) target = $region168
        $region167: #{tpu_custom_call.1} parent=115 // pred_region
          %971 = dma.done [#allocation21], 16
        $region168: #{tpu_custom_call.1} parent=115 // pred_fallthru
          _
        // Predicated region
        $region169: #{tpu_custom_call.1} parent=115 // pred_check
          %p972 = pneg %p418
        $region170: #{tpu_custom_call.1} parent=115 // pred_check_branch
          %974 = sbr.rel (%p972) target = $region172
        $region171: #{tpu_custom_call.1} parent=115 // pred_region
          %975 = dma.done [#allocation24], 512
        $region172: #{tpu_custom_call.1} parent=115 // pred_fallthru
          _
        // Predicated region
        $region173: #{tpu_custom_call.1} parent=115 // pred_check
          %p976 = pneg %p439
        $region174: #{tpu_custom_call.1} parent=115 // pred_check_branch
          %978 = sbr.rel (%p976) target = $region176
        $region175: #{tpu_custom_call.1} parent=115 // pred_region
          %979 = dma.done [#allocation24], 32
        $region176: #{tpu_custom_call.1} parent=115 // pred_fallthru
          _
        // Predicated region
        $region177: #{tpu_custom_call.1} parent=115 // pred_check
          %p980 = pneg %p460
        $region178: #{tpu_custom_call.1} parent=115 // pred_check_branch
          %982 = sbr.rel (%p980) target = $region180
        $region179: #{tpu_custom_call.1} parent=115 // pred_region
          %983 = dma.done [#allocation27], 2048
        $region180: #{tpu_custom_call.1} parent=115 // pred_fallthru
          _
        // Predicated region
        $region181: #{tpu_custom_call.1} parent=115 // pred_check
          %p984 = pneg %p481
        $region182: #{tpu_custom_call.1} parent=115 // pred_check_branch
          %986 = sbr.rel (%p984) target = $region184
        $region183: #{tpu_custom_call.1} parent=115 // pred_region
          %987 = dma.done [#allocation27], 16
        $region184: #{tpu_custom_call.1} parent=115 // pred_fallthru
          _
        // Predicated region
        $region185: #{tpu_custom_call.1} parent=115 // pred_check
          %p988 = pneg %p502
        $region186: #{tpu_custom_call.1} parent=115 // pred_check_branch
          %990 = sbr.rel (%p988) target = $region188
        $region187: #{tpu_custom_call.1} parent=115 // pred_region
          %991 = dma.done [#allocation30], 512
        $region188: #{tpu_custom_call.1} parent=115 // pred_fallthru
          _
        // Predicated region
        $region189: #{tpu_custom_call.1} parent=115 // pred_check
          %p992 = pneg %p523
        $region190: #{tpu_custom_call.1} parent=115 // pred_check_branch
          %994 = sbr.rel (%p992) target = $region192
        $region191: #{tpu_custom_call.1} parent=115 // pred_region
          %995 = dma.done [#allocation30], 32
        $region192: #{tpu_custom_call.1} parent=115 // pred_fallthru
          _
        %s996 = sand.u32 %s64, 1
        %s997 = scalar_lea.sflag [#allocation3], %s996
        %s998 = sand.u32 %s64, 1
        %s999 = smul.addr %s998, 8
        %s1000 = scalar_lea.vmem [#allocation2], %s999
        %p1001 = pneg %p77
        %p1002 = pneg %p74
        %p1003 = scmp.lt.s32.totalorder %s56, 1
        %s1004 = scalar_select %p1003, %s56, 1
        %s1005 = scalar_lea.vmem %s1, %s1004
        %p1006 = pneg %p103
        %p1007 = pneg %p100
        %p1008 = pneg %p124
        %p1009 = pneg %p121
        %p1010 = pneg %p145
        %p1011 = pneg %p142
        %p1012 = pneg %p166
        %p1013 = pneg %p163
        %p1014 = pneg %p187
        %p1015 = pneg %p184
        %p1016 = pneg %p208
        %p1017 = pneg %p205
        %p1018 = pneg %p229
        %p1019 = pneg %p226
        %p1020 = pneg %p250
        %p1021 = pneg %p247
        %p1022 = pneg %p271
        %p1023 = pneg %p268
        %p1024 = pneg %p292
        %p1025 = pneg %p289
        %p1026 = pneg %p313
        %p1027 = pneg %p310
        %p1028 = pneg %p334
        %p1029 = pneg %p331
        %p1030 = pneg %p355
        %p1031 = pneg %p352
        %p1032 = pneg %p376
        %p1033 = pneg %p373
        %p1034 = pneg %p397
        %p1035 = pneg %p394
        %p1036 = pneg %p418
        %p1037 = pneg %p415
        %p1038 = pneg %p439
        %p1039 = pneg %p436
        %p1040 = pneg %p460
        %p1041 = pneg %p457
        %p1042 = pneg %p481
        %p1043 = pneg %p478
        %p1044 = pneg %p502
        %p1045 = pneg %p499
        %p1046 = pneg %p523
        %p1047 = pneg %p520
        %p1048 = pneg %p544
        %p1049 = pneg %p541
        %p1050 = pneg %p565
        %p1051 = pneg %p562
        %p1052 = pneg %p591
        %p1053 = pneg %p588
        %s1054 = sand.u32 %s578, 1
        %s1055 = scalar_lea.sflag [#allocation4], %s1054
        %s1056 = sand.u32 %s578, 1
        %s1057 = scalar_lea.vmem [#allocation32], %s1056
        %p1058 = pneg %p617
        %p1059 = pneg %p614
        %s1060 = sand.u32 %s56, 1
        %s1061 = scalar_lea.sflag [#allocation34], %s1060
        %s1062 = sand.u32 %s604, 1
        %s1063 = scalar_lea.vmem [#allocation33], %s1062
        %p1064 = pneg %p643
        %p1065 = pneg %p640
        %s1066 = sand.u32 %s56, 1
        %s1067 = scalar_lea.sflag [#allocation34], %s1066
        %s1068 = sand.u32 %s630, 1
        %s1069 = smul.addr %s1068, 8
        %s1070 = scalar_lea.vmem [#allocation35], %s1069
        %p1071 = scmp.lt.s32.totalorder %s56, 1
        %s1072 = scalar_select %p1071, %s56, 1
        %s1073 = scalar_lea.vmem %s1, %s1072
        %v1075 = vld [vmem:[%s919] sm:$0xff]
        %v1076 = vld [vmem:[%s1073] sm:$0x1]
        %v1077 = vld [vmem:[#allocation5] sm:$0xf]
        %v1078 = vld [vmem:[#allocation5 + $0x4] sm:$0xf]
        %v1079 = vld [vmem:[#allocation5 + $0x8] sm:$0xf]
        %v1080 = vld [vmem:[#allocation5 + $0xc] sm:$0xf]
        %v1081 = vpack.c.bf16 %v1075, %v1075
        %v1082 = vld [vmem:[%s3] sm:$0x1]
        %v1084 = vlaneseq
        %v1085 = vshrl.u32 %v1084, 7
        %v1086 = vsub.s32 0, %v1085
        %v1087 = vrot.slane %v1082, %v1086
        %v1093 = vunpack.c.l.b16 %v1077
        %v1094 = vunpack.c.l.b16 %v1078
        %v1095 = vunpack.c.l.b16 %v1079
        %v1096 = vunpack.c.l.b16 %v1080
        %v1097 = vpack.c.b16 %v1094, %v1093
        %v1098 = vpack.c.b16 %v1096, %v1095
        %vm1101 = vcmask 261120
        %v1103 = vsel %vm1101, %v1081, 0
        %1105 = vmatprep.subr.bf16.mxu0 0
        %1106 = vmatpush1.bf16.msra.mxu0 %v1097
        %1107 = vmatprep.subr.bf16.mxu0 0
        %1108 = vmatpush1.bf16.msra.mxu0 %v1098
        %1109 = vmatprep.subr.bf16.mxu0 0
        %1110 = vmatpush1.bf16.msra.mxu0 0
        %1111 = vmatprep.subr.bf16.mxu0 0
        %1112 = vmatpush1.bf16.msra.mxu0 0
        %1113 = vmatprep.subr.bf16.mxu0 0
        %1114 = vmatpush1.bf16.msra.mxu0 0
        %1115 = vmatprep.subr.bf16.mxu0 0
        %1116 = vmatpush1.bf16.msra.mxu0 0
        %1117 = vmatprep.subr.bf16.mxu0 0
        %1118 = vmatpush1.bf16.msra.mxu0 0
        %1119 = vmatprep.subr.bf16.mxu0 0
        %1120 = vmatpush1.bf16.msra.mxu0 0
        %1121 = vmatprep.subr.bf16.mxu0 0
        %1122 = vmatpush1.bf16.msra.mxu0 0
        %1123 = vmatprep.subr.bf16.mxu0 0
        %1124 = vmatpush1.bf16.msra.mxu0 0
        %1125 = vmatprep.subr.bf16.mxu0 0
        %1126 = vmatpush1.bf16.msra.mxu0 0
        %1127 = vmatprep.subr.bf16.mxu0 0
        %1128 = vmatpush1.bf16.msra.mxu0 0
        %1129 = vmatprep.subr.bf16.mxu0 0
        %1130 = vmatpush1.bf16.msra.mxu0 0
        %1131 = vmatprep.subr.bf16.mxu0 0
        %1132 = vmatpush1.bf16.msra.mxu0 0
        %1133 = vmatprep.subr.bf16.mxu0 0
        %1134 = vmatpush1.bf16.msra.mxu0 0
        %1135 = vmatprep.subr.bf16.mxu0 0
        %1136 = vmatpush1.bf16.msra.mxu0 0
        %1137 = vmatprep.mubr.bf16.mxu0 0
        %1138 = vmatmul.mubr.bf16.gmra.mrb[0].mxu0 %v1103
        %v1139 = vpop.f32.mrb[0].mxu0
        %v1140 = vadd.f32 %v1087, %v1139
        %v1141 = vpop.f32.mrb[0].mxu0
        %v1142 = vpop.f32.mrb[0].mxu0
        %v1143 = vpop.f32.mrb[0].mxu0
        %1144 = vdwg.mxu0
        %v1145 = vsub.f32 1.0, %v1076
        %v1146 = vmul.f32 %v1145, -1e+09
        %v1147 = vpack.c.bf16 %v1140, %v1140
        %1149 = vrot.lane.b32.xlu0 %v1147, 96
        %v1150 = vpop.permute.xlu0 %1149
        %v1152 = vsel %vm1101, %v1147, 0
        %v1155 = vsel %vm1101, %v1150, 0
        %1157 = vmatprep.subr.bf16.mxu0 0
        %1158 = vmatpush1.bf16.xpose.msra.mxu0 %v1155
        %1159 = vmatprep.subr.bf16.mxu0 0
        %1160 = vmatpush1.bf16.xpose.msra.mxu0 0
        %1161 = vmatprep.subr.bf16.mxu0 0
        %1162 = vmatpush1.bf16.xpose.msra.mxu0 0
        %1163 = vmatprep.subr.bf16.mxu0 0
        %1164 = vmatpush1.bf16.xpose.msra.mxu0 0
        %1165 = vmatprep.subr.bf16.mxu0 0
        %1166 = vmatpush1.bf16.xpose.msra.mxu0 0
        %1167 = vmatprep.subr.bf16.mxu0 0
        %1168 = vmatpush1.bf16.xpose.msra.mxu0 0
        %1169 = vmatprep.subr.bf16.mxu0 0
        %1170 = vmatpush1.bf16.xpose.msra.mxu0 0
        %1171 = vmatprep.subr.bf16.mxu0 0
        %1172 = vmatpush1.bf16.xpose.msra.mxu0 0
        %1173 = vmatprep.subr.bf16.mxu0 0
        %1174 = vmatpush1.bf16.xpose.msra.mxu0 0
        %1175 = vmatprep.subr.bf16.mxu0 0
        %1176 = vmatpush1.bf16.xpose.msra.mxu0 0
        %1177 = vmatprep.subr.bf16.mxu0 0
        %1178 = vmatpush1.bf16.xpose.msra.mxu0 0
        %1179 = vmatprep.subr.bf16.mxu0 0
        %1180 = vmatpush1.bf16.xpose.msra.mxu0 0
        %1181 = vmatprep.subr.bf16.mxu0 0
        %1182 = vmatpush1.bf16.xpose.msra.mxu0 0
        %1183 = vmatprep.subr.bf16.mxu0 0
        %1184 = vmatpush1.bf16.xpose.msra.mxu0 0
        %1185 = vmatprep.subr.bf16.mxu0 0
        %1186 = vmatpush1.bf16.xpose.msra.mxu0 0
        %1187 = vmatprep.subr.bf16.mxu0 0
        %1188 = vmatpush1.bf16.xpose.msra.mxu0 0
        %1189 = vmatprep.mubr.bf16.mxu0 0
        %1190 = vmatmul.mubr.bf16.gmra.mrb[0].mxu0 %v1152
        %v1191 = vpop.f32.mrb[0].mxu0
        %v1192 = vadd.f32 0.0, %v1191
        %v1193 = vpop.f32.mrb[0].mxu0
        %v1194 = vpop.f32.mrb[0].mxu0
        %v1195 = vpop.f32.mrb[0].mxu0
        %1196 = vdwg.mxu0
        %v1197 = vmul.f32 %v1192, 0.17677669
        %v1199 = vlaneseq
        %v1200 = vshrl.u32 %v1199, 7
        %v1201 = vsub.s32 0, %v1200
        %v1202 = vrot.slane %v1146, %v1201
        %v1204 = vadd.f32 %v1197, %v1202
        %vm1205 = vcmask 64512
        %v1206 = vsel %vm1205, %v1204, -inf
        %1207 = vmax.xlane.f32.xlu0 %v1206
        %v1208 = vpop.xlane.xlu0 %1207
        %v1209 = vsub.f32 %v1204, %v1208
        %v1210 = vmul.f32 %v1209, 1.442695
        %v1211 = vpow.pop %v1210
        %v1212 = vsel %vm1205, %v1211, 0.0
        %1213 = vadd.xlane.f32.xlu0 %v1212
        %v1214 = vpop.xlane.xlu0 %1213
        %v1215 = vrcp.pop %v1214
        %v1216 = vmul.f32 %v1211, %v1215
        %v1217 = vpack.c.bf16 %v1216, %v1216
        %1218 = vrot.lane.b32.xlu0 %v1147, 64
        %v1219 = vpop.permute.xlu0 %1218
        %v1221 = vsel %vm1205, %v1217, 0
        %vm1223 = vcmask 1043456
        %v1225 = vsel %vm1223, %v1219, 0
        %1227 = vmatprep.subr.bf16.mxu0 0
        %1228 = vmatpush1.bf16.msra.mxu0 %v1225
        %1229 = vmatprep.subr.bf16.mxu0 0
        %1230 = vmatpush1.bf16.msra.mxu0 0
        %1231 = vmatprep.subr.bf16.mxu0 0
        %1232 = vmatpush1.bf16.msra.mxu0 0
        %1233 = vmatprep.subr.bf16.mxu0 0
        %1234 = vmatpush1.bf16.msra.mxu0 0
        %1235 = vmatprep.subr.bf16.mxu0 0
        %1236 = vmatpush1.bf16.msra.mxu0 0
        %1237 = vmatprep.subr.bf16.mxu0 0
        %1238 = vmatpush1.bf16.msra.mxu0 0
        %1239 = vmatprep.subr.bf16.mxu0 0
        %1240 = vmatpush1.bf16.msra.mxu0 0
        %1241 = vmatprep.subr.bf16.mxu0 0
        %1242 = vmatpush1.bf16.msra.mxu0 0
        %1243 = vmatprep.subr.bf16.mxu0 0
        %1244 = vmatpush1.bf16.msra.mxu0 0
        %1245 = vmatprep.subr.bf16.mxu0 0
        %1246 = vmatpush1.bf16.msra.mxu0 0
        %1247 = vmatprep.subr.bf16.mxu0 0
        %1248 = vmatpush1.bf16.msra.mxu0 0
        %1249 = vmatprep.subr.bf16.mxu0 0
        %1250 = vmatpush1.bf16.msra.mxu0 0
        %1251 = vmatprep.subr.bf16.mxu0 0
        %1252 = vmatpush1.bf16.msra.mxu0 0
        %1253 = vmatprep.subr.bf16.mxu0 0
        %1254 = vmatpush1.bf16.msra.mxu0 0
        %1255 = vmatprep.subr.bf16.mxu0 0
        %1256 = vmatpush1.bf16.msra.mxu0 0
        %1257 = vmatprep.subr.bf16.mxu0 0
        %1258 = vmatpush1.bf16.msra.mxu0 0
        %1259 = vmatprep.mubr.bf16.mxu0 0
        %1260 = vmatmul.mubr.bf16.gmra.mrb[0].mxu0 %v1221
        %v1261 = vpop.f32.mrb[0].mxu0
        %v1262 = vadd.f32 0.0, %v1261
        %v1263 = vpop.f32.mrb[0].mxu0
        %v1264 = vpop.f32.mrb[0].mxu0
        %v1265 = vpop.f32.mrb[0].mxu0
        %1266 = vdwg.mxu0
        %v1267 = vld [vmem:[#allocation7] sm:$0xf]
        %v1268 = vld [vmem:[#allocation7 + $0x4] sm:$0xf]
        %v1269 = vld [vmem:[#allocation7 + $0x8] sm:$0xf]
        %v1270 = vld [vmem:[#allocation7 + $0xc] sm:$0xf]
        %v1271 = vpack.c.bf16 %v1262, %v1262
        %v1272 = vld [vmem:[#allocation8] sm:$0x1]
        %v1274 = vlaneseq
        %v1275 = vshrl.u32 %v1274, 7
        %v1276 = vsub.s32 0, %v1275
        %v1277 = vrot.slane %v1272, %v1276
        %v1283 = vunpack.c.l.b16 %v1267
        %v1284 = vunpack.c.l.b16 %v1268
        %v1285 = vunpack.c.l.b16 %v1269
        %v1286 = vunpack.c.l.b16 %v1270
        %v1287 = vpack.c.b16 %v1284, %v1283
        %v1288 = vpack.c.b16 %v1286, %v1285
        %v1292 = vsel %vm1101, %v1271, 0
        %1294 = vmatprep.subr.bf16.mxu0 0
        %1295 = vmatpush1.bf16.msra.mxu0 %v1287
        %1296 = vmatprep.subr.bf16.mxu0 0
        %1297 = vmatpush1.bf16.msra.mxu0 %v1288
        %1298 = vmatprep.subr.bf16.mxu0 0
        %1299 = vmatpush1.bf16.msra.mxu0 0
        %1300 = vmatprep.subr.bf16.mxu0 0
        %1301 = vmatpush1.bf16.msra.mxu0 0
        %1302 = vmatprep.subr.bf16.mxu0 0
        %1303 = vmatpush1.bf16.msra.mxu0 0
        %1304 = vmatprep.subr.bf16.mxu0 0
        %1305 = vmatpush1.bf16.msra.mxu0 0
        %1306 = vmatprep.subr.bf16.mxu0 0
        %1307 = vmatpush1.bf16.msra.mxu0 0
        %1308 = vmatprep.subr.bf16.mxu0 0
        %1309 = vmatpush1.bf16.msra.mxu0 0
        %1310 = vmatprep.subr.bf16.mxu0 0
        %1311 = vmatpush1.bf16.msra.mxu0 0
        %1312 = vmatprep.subr.bf16.mxu0 0
        %1313 = vmatpush1.bf16.msra.mxu0 0
        %1314 = vmatprep.subr.bf16.mxu0 0
        %1315 = vmatpush1.bf16.msra.mxu0 0
        %1316 = vmatprep.subr.bf16.mxu0 0
        %1317 = vmatpush1.bf16.msra.mxu0 0
        %1318 = vmatprep.subr.bf16.mxu0 0
        %1319 = vmatpush1.bf16.msra.mxu0 0
        %1320 = vmatprep.subr.bf16.mxu0 0
        %1321 = vmatpush1.bf16.msra.mxu0 0
        %1322 = vmatprep.subr.bf16.mxu0 0
        %1323 = vmatpush1.bf16.msra.mxu0 0
        %1324 = vmatprep.subr.bf16.mxu0 0
        %1325 = vmatpush1.bf16.msra.mxu0 0
        %1326 = vmatprep.mubr.bf16.mxu0 0
        %1327 = vmatmul.mubr.bf16.gmra.mrb[0].mxu0 %v1292
        %v1328 = vpop.f32.mrb[0].mxu0
        %v1329 = vadd.f32 %v1277, %v1328
        %v1330 = vpop.f32.mrb[0].mxu0
        %v1331 = vpop.f32.mrb[0].mxu0
        %v1332 = vpop.f32.mrb[0].mxu0
        %1333 = vdwg.mxu0
        %v1334 = vadd.f32 %v1075, %v1329
        %v1335 = vld [vmem:[#allocation10] sm:$0x1]
        %v1336 = vld [vmem:[#allocation11] sm:$0x1]
        %v1337 = vsel %vm1101, %v1334, 0.0
        %1338 = vadd.xlane.f32.xlu0 %v1337
        %v1339 = vpop.xlane.xlu0 %1338
        %v1340 = vrcp.pop 32.0
        %v1341 = vmul.f32 %v1339, %v1340
        %v1342 = vsub.f32 %v1334, %v1341
        %v1343 = vmul.f32 %v1342, %v1342
        %v1344 = vsel %vm1101, %v1343, 0.0
        %1345 = vadd.xlane.f32.xlu0 %v1344
        %v1346 = vpop.xlane.xlu0 %1345
        %v1347 = vmul.f32 %v1346, %v1340
        %v1348 = vadd.f32 %v1347, 1e-05
        %v1349 = vrsqrt.pop %v1348
        %v1350 = vmul.f32 %v1342, %v1349
        %v1352 = vlaneseq
        %v1353 = vshrl.u32 %v1352, 7
        %v1354 = vsub.s32 0, %v1353
        %v1355 = vrot.slane %v1335, %v1354
        %v1357 = vmul.f32 %v1350, %v1355
        %v1359 = vlaneseq
        %v1360 = vshrl.u32 %v1359, 7
        %v1361 = vsub.s32 0, %v1360
        %v1362 = vrot.slane %v1336, %v1361
        %v1364 = vadd.f32 %v1357, %v1362
        %v1365 = vld [vmem:[#allocation13] sm:$0xf]
        %v1366 = vld [vmem:[#allocation13 + $0x4] sm:$0xf]
        %v1367 = vld [vmem:[#allocation13 + $0x8] sm:$0xf]
        %v1368 = vld [vmem:[#allocation13 + $0xc] sm:$0xf]
        %v1369 = vpack.c.bf16 %v1364, %v1364
        %v1370 = vld [vmem:[#allocation14] sm:$0x1]
        %v1372 = vlaneseq
        %v1373 = vshrl.u32 %v1372, 7
        %v1374 = vsub.s32 0, %v1373
        %v1375 = vrot.slane %v1370, %v1374
        %v1381 = vunpack.c.l.b16 %v1365
        %v1382 = vunpack.c.l.b16 %v1366
        %v1383 = vunpack.c.l.b16 %v1367
        %v1384 = vunpack.c.l.b16 %v1368
        %v1385 = vpack.c.b16 %v1382, %v1381
        %v1386 = vpack.c.b16 %v1384, %v1383
        %v1390 = vsel %vm1101, %v1369, 0
        %1392 = vmatprep.subr.bf16.mxu0 0
        %1393 = vmatpush1.bf16.msra.mxu0 %v1385
        %1394 = vmatprep.subr.bf16.mxu0 0
        %1395 = vmatpush1.bf16.msra.mxu0 %v1386
        %1396 = vmatprep.subr.bf16.mxu0 0
        %1397 = vmatpush1.bf16.msra.mxu0 0
        %1398 = vmatprep.subr.bf16.mxu0 0
        %1399 = vmatpush1.bf16.msra.mxu0 0
        %1400 = vmatprep.subr.bf16.mxu0 0
        %1401 = vmatpush1.bf16.msra.mxu0 0
        %1402 = vmatprep.subr.bf16.mxu0 0
        %1403 = vmatpush1.bf16.msra.mxu0 0
        %1404 = vmatprep.subr.bf16.mxu0 0
        %1405 = vmatpush1.bf16.msra.mxu0 0
        %1406 = vmatprep.subr.bf16.mxu0 0
        %1407 = vmatpush1.bf16.msra.mxu0 0
        %1408 = vmatprep.subr.bf16.mxu0 0
        %1409 = vmatpush1.bf16.msra.mxu0 0
        %1410 = vmatprep.subr.bf16.mxu0 0
        %1411 = vmatpush1.bf16.msra.mxu0 0
        %1412 = vmatprep.subr.bf16.mxu0 0
        %1413 = vmatpush1.bf16.msra.mxu0 0
        %1414 = vmatprep.subr.bf16.mxu0 0
        %1415 = vmatpush1.bf16.msra.mxu0 0
        %1416 = vmatprep.subr.bf16.mxu0 0
        %1417 = vmatpush1.bf16.msra.mxu0 0
        %1418 = vmatprep.subr.bf16.mxu0 0
        %1419 = vmatpush1.bf16.msra.mxu0 0
        %1420 = vmatprep.subr.bf16.mxu0 0
        %1421 = vmatpush1.bf16.msra.mxu0 0
        %1422 = vmatprep.subr.bf16.mxu0 0
        %1423 = vmatpush1.bf16.msra.mxu0 0
        %1424 = vmatprep.mubr.bf16.mxu0 0
        %1425 = vmatmul.mubr.bf16.gmra.mrb[0].mxu0 %v1390
        %v1426 = vpop.f32.mrb[0].mxu0
        %v1427 = vadd.f32 %v1375, %v1426
        %v1428 = vpop.f32.mrb[0].mxu0
        %v1429 = vpop.f32.mrb[0].mxu0
        %v1430 = vpop.f32.mrb[0].mxu0
        %1431 = vdwg.mxu0
        %v1432 = vmul.f32 %v1427, %v1427
        %v1433 = vmul.f32 %v1427, %v1432
        %v1434 = vmul.f32 %v1433, 0.044715
        %v1435 = vadd.f32 %v1427, %v1434
        %v1436 = vmul.f32 %v1435, 0.7978846
        %v1437 = vtanh.pop %v1436
        %v1438 = vadd.f32 %v1437, 1.0
        %v1439 = vmul.f32 %v1438, 0.5
        %v1440 = vmul.f32 %v1427, %v1439
        %v1441 = vld [vmem:[%s10] sm:$0xf]
        %v1442 = vld [vmem:[%s10 + $0x4] sm:$0xf]
        %v1443 = vld [vmem:[%s10 + $0x8] sm:$0xf]
        %v1444 = vld [vmem:[%s10 + $0xc] sm:$0xf]
        %v1445 = vld [vmem:[%s10 + $0x10] sm:$0xf]
        %v1446 = vld [vmem:[%s10 + $0x14] sm:$0xf]
        %v1447 = vld [vmem:[%s10 + $0x18] sm:$0xf]
        %v1448 = vld [vmem:[%s10 + $0x1c] sm:$0xf]
        %v1449 = vpack.c.bf16 %v1440, %v1440
        %v1450 = vld [vmem:[#allocation16] sm:$0x1]
        %v1452 = vlaneseq
        %v1453 = vshrl.u32 %v1452, 7
        %v1454 = vsub.s32 0, %v1453
        %v1455 = vrot.slane %v1450, %v1454
        %v1465 = vunpack.c.l.b16 %v1441
        %v1466 = vunpack.c.l.b16 %v1442
        %v1467 = vunpack.c.l.b16 %v1443
        %v1468 = vunpack.c.l.b16 %v1444
        %v1469 = vunpack.c.l.b16 %v1445
        %v1470 = vunpack.c.l.b16 %v1446
        %v1471 = vunpack.c.l.b16 %v1447
        %v1472 = vunpack.c.l.b16 %v1448
        %v1473 = vpack.c.b16 %v1466, %v1465
        %v1474 = vpack.c.b16 %v1468, %v1467
        %v1475 = vpack.c.b16 %v1470, %v1469
        %v1476 = vpack.c.b16 %v1472, %v1471
        %vm1481 = vcmask 523264
        %v1483 = vsel %vm1481, %v1449, 0
        %1485 = vmatprep.subr.bf16.mxu0 0
        %1486 = vmatpush1.bf16.msra.mxu0 %v1473
        %1487 = vmatprep.subr.bf16.mxu0 0
        %1488 = vmatpush1.bf16.msra.mxu0 %v1474
        %1489 = vmatprep.subr.bf16.mxu0 0
        %1490 = vmatpush1.bf16.msra.mxu0 %v1475
        %1491 = vmatprep.subr.bf16.mxu0 0
        %1492 = vmatpush1.bf16.msra.mxu0 %v1476
        %1493 = vmatprep.subr.bf16.mxu0 0
        %1494 = vmatpush1.bf16.msra.mxu0 0
        %1495 = vmatprep.subr.bf16.mxu0 0
        %1496 = vmatpush1.bf16.msra.mxu0 0
        %1497 = vmatprep.subr.bf16.mxu0 0
        %1498 = vmatpush1.bf16.msra.mxu0 0
        %1499 = vmatprep.subr.bf16.mxu0 0
        %1500 = vmatpush1.bf16.msra.mxu0 0
        %1501 = vmatprep.subr.bf16.mxu0 0
        %1502 = vmatpush1.bf16.msra.mxu0 0
        %1503 = vmatprep.subr.bf16.mxu0 0
        %1504 = vmatpush1.bf16.msra.mxu0 0
        %1505 = vmatprep.subr.bf16.mxu0 0
        %1506 = vmatpush1.bf16.msra.mxu0 0
        %1507 = vmatprep.subr.bf16.mxu0 0
        %1508 = vmatpush1.bf16.msra.mxu0 0
        %1509 = vmatprep.subr.bf16.mxu0 0
        %1510 = vmatpush1.bf16.msra.mxu0 0
        %1511 = vmatprep.subr.bf16.mxu0 0
        %1512 = vmatpush1.bf16.msra.mxu0 0
        %1513 = vmatprep.subr.bf16.mxu0 0
        %1514 = vmatpush1.bf16.msra.mxu0 0
        %1515 = vmatprep.subr.bf16.mxu0 0
        %1516 = vmatpush1.bf16.msra.mxu0 0
        %1517 = vmatprep.mubr.bf16.mxu0 0
        %1518 = vmatmul.mubr.bf16.gmra.mrb[0].mxu0 %v1483
        %v1519 = vpop.f32.mrb[0].mxu0
        %v1520 = vadd.f32 %v1455, %v1519
        %v1521 = vpop.f32.mrb[0].mxu0
        %v1522 = vpop.f32.mrb[0].mxu0
        %v1523 = vpop.f32.mrb[0].mxu0
        %1524 = vdwg.mxu0
        %v1525 = vadd.f32 %v1364, %v1520
        %v1526 = vld [vmem:[#allocation17] sm:$0x1]
        %v1527 = vld [vmem:[#allocation19] sm:$0x1]
        %v1528 = vsel %vm1101, %v1525, 0.0
        %1529 = vadd.xlane.f32.xlu0 %v1528
        %v1530 = vpop.xlane.xlu0 %1529
        %v1531 = vmul.f32 %v1530, %v1340
        %v1532 = vsub.f32 %v1525, %v1531
        %v1533 = vmul.f32 %v1532, %v1532
        %v1534 = vsel %vm1101, %v1533, 0.0
        %1535 = vadd.xlane.f32.xlu0 %v1534
        %v1536 = vpop.xlane.xlu0 %1535
        %v1537 = vmul.f32 %v1536, %v1340
        %v1538 = vadd.f32 %v1537, 1e-05
        %v1539 = vrsqrt.pop %v1538
        %v1540 = vmul.f32 %v1532, %v1539
        %v1542 = vlaneseq
        %v1543 = vshrl.u32 %v1542, 7
        %v1544 = vsub.s32 0, %v1543
        %v1545 = vrot.slane %v1526, %v1544
        %v1547 = vmul.f32 %v1540, %v1545
        %v1549 = vlaneseq
        %v1550 = vshrl.u32 %v1549, 7
        %v1551 = vsub.s32 0, %v1550
        %v1552 = vrot.slane %v1527, %v1551
        %v1554 = vadd.f32 %v1547, %v1552
        %v1556 = vsel %vm1205, %v1076, 0
        %1558 = vmatprep.subr.mxu0 0.0
        %1559 = vmatpush1.msra.mxu0 %v1554
        %1560 = vmatprep.subr.mxu0 0.0
        %1561 = vmatpush1.msra.mxu0 0.0
        %1562 = vmatprep.subr.mxu0 0.0
        %1563 = vmatpush1.msra.mxu0 0.0
        %1564 = vmatprep.subr.mxu0 0.0
        %1565 = vmatpush1.msra.mxu0 0.0
        %1566 = vmatprep.subr.mxu0 0.0
        %1567 = vmatpush1.msra.mxu0 0.0
        %1568 = vmatprep.subr.mxu0 0.0
        %1569 = vmatpush1.msra.mxu0 0.0
        %1570 = vmatprep.subr.mxu0 0.0
        %1571 = vmatpush1.msra.mxu0 0.0
        %1572 = vmatprep.subr.mxu0 0.0
        %1573 = vmatpush1.msra.mxu0 0.0
        %1574 = vmatprep.subr.mxu0 0.0
        %1575 = vmatpush1.msra.mxu0 0.0
        %1576 = vmatprep.subr.mxu0 0.0
        %1577 = vmatpush1.msra.mxu0 0.0
        %1578 = vmatprep.subr.mxu0 0.0
        %1579 = vmatpush1.msra.mxu0 0.0
        %1580 = vmatprep.subr.mxu0 0.0
        %1581 = vmatpush1.msra.mxu0 0.0
        %1582 = vmatprep.subr.mxu0 0.0
        %1583 = vmatpush1.msra.mxu0 0.0
        %1584 = vmatprep.subr.mxu0 0.0
        %1585 = vmatpush1.msra.mxu0 0.0
        %1586 = vmatprep.subr.mxu0 0.0
        %1587 = vmatpush1.msra.mxu0 0.0
        %1588 = vmatprep.subr.mxu0 0.0
        %1589 = vmatpush1.msra.mxu0 0.0
        %1590 = vmatprep.subr.mxu0 0.0
        %1591 = vmatpush1.msra.mxu0 0.0
        %1592 = vmatprep.subr.mxu0 0.0
        %1593 = vmatpush1.msra.mxu0 0.0
        %1594 = vmatprep.subr.mxu0 0.0
        %1595 = vmatpush1.msra.mxu0 0.0
        %1596 = vmatprep.subr.mxu0 0.0
        %1597 = vmatpush1.msra.mxu0 0.0
        %1598 = vmatprep.subr.mxu0 0.0
        %1599 = vmatpush1.msra.mxu0 0.0
        %1600 = vmatprep.subr.mxu0 0.0
        %1601 = vmatpush1.msra.mxu0 0.0
        %1602 = vmatprep.subr.mxu0 0.0
        %1603 = vmatpush1.msra.mxu0 0.0
        %1604 = vmatprep.subr.mxu0 0.0
        %1605 = vmatpush1.msra.mxu0 0.0
        %1606 = vmatprep.subr.mxu0 0.0
        %1607 = vmatpush1.msra.mxu0 0.0
        %1608 = vmatprep.subr.mxu0 0.0
        %1609 = vmatpush1.msra.mxu0 0.0
        %1610 = vmatprep.subr.mxu0 0.0
        %1611 = vmatpush1.msra.mxu0 0.0
        %1612 = vmatprep.subr.mxu0 0.0
        %1613 = vmatpush1.msra.mxu0 0.0
        %1614 = vmatprep.subr.mxu0 0.0
        %1615 = vmatpush1.msra.mxu0 0.0
        %1616 = vmatprep.subr.mxu0 0.0
        %1617 = vmatpush1.msra.mxu0 0.0
        %1618 = vmatprep.subr.mxu0 0.0
        %1619 = vmatpush1.msra.mxu0 0.0
        %1620 = vmatprep.subr.mxu0 0.0
        %1621 = vmatpush1.msra.mxu0 0.0
        %1622 = vmatprep.mubr.f32.mxu0 0.0
        %1623 = vmatmul.mubr.f32.gmra.mrb[0].mxu0 %v1556
        %v1624 = vpop.f32.mrb[0].mxu0
        %v1625 = vadd.f32 0.0, %v1624
        %v1626 = vpop.f32.mrb[0].mxu0
        %1627 = vdwg.mxu0
        %vm1628 = vcmask 57344
        %v1629 = vsel %vm1628, %v1076, 0.0
        %1630 = vadd.xlane.f32.xlu0 %v1629
        %v1631 = vpop.xlane.xlu0 %1630
        %v1632 = vmax.f32 %v1631, 1e-09
        %v1633 = vrcp.pop %v1632
        %v1634 = vmul.f32 %v1625, %v1633
        %v1635 = vld [vmem:[#allocation20] sm:$0x1]
        %v1636 = vld [vmem:[#allocation22] sm:$0x1]
        %vm1637 = vcmask 253952
        %v1638 = vsel %vm1637, %v1634, 0.0
        %1639 = vadd.xlane.f32.xlu0 %v1638
        %v1640 = vpop.xlane.xlu0 %1639
        %v1641 = vmul.f32 %v1640, %v1340
        %v1642 = vsub.f32 %v1634, %v1641
        %v1643 = vmul.f32 %v1642, %v1642
        %v1644 = vsel %vm1637, %v1643, 0.0
        %1645 = vadd.xlane.f32.xlu0 %v1644
        %v1646 = vpop.xlane.xlu0 %1645
        %v1647 = vmul.f32 %v1646, %v1340
        %v1648 = vadd.f32 %v1647, 1e-05
        %v1649 = vrsqrt.pop %v1648
        %v1650 = vmul.f32 %v1642, %v1649
        %v1651 = vmul.f32 %v1650, %v1635
        %v1652 = vadd.f32 %v1651, %v1636
        %v1653 = vmul.f32 %v1652, %v1652
        %v1654 = vsel %vm1637, %v1653, 0.0
        %1655 = vadd.xlane.f32.xlu0 %v1654
        %v1656 = vpop.xlane.xlu0 %1655
        %v1657 = vmax.f32 %v1656, 1e-24
        %v1658 = vrsqrt.pop %v1657
        %v1659 = vmul.f32 %v1652, %v1658
        %v1660 = vsel %vm1101, %v1659, 0.0
        %1661 = vst [vmem:[%s1057] sm:$0x1] %v1660
        %v1662 = vld [vmem:[#allocation23] sm:$0xff]
        %v1663 = vld [vmem:[#allocation23 + $0x8] sm:$0xff]
        %v1664 = vld [vmem:[#allocation23 + $0x10] sm:$0xff]
        %v1665 = vld [vmem:[#allocation23 + $0x18] sm:$0xff]
        %v1666 = vpack.c.bf16 %v1659, %v1659
        %v1667 = vld [vmem:[#allocation25] sm:$0x3]
        %v1672 = vunpack.c.l.b16 %v1662
        %v1673 = vunpack.c.h.b16 %v1662
        %v1674 = vunpack.c.l.b16 %v1663
        %v1675 = vunpack.c.h.b16 %v1663
        %v1676 = vunpack.c.l.b16 %v1664
        %v1677 = vunpack.c.h.b16 %v1664
        %v1678 = vunpack.c.l.b16 %v1665
        %v1679 = vunpack.c.h.b16 %v1665
        %v1680 = vpack.c.b16 %v1674, %v1672
        %v1681 = vpack.c.b16 %v1675, %v1673
        %v1682 = vpack.c.b16 %v1678, %v1676
        %v1683 = vpack.c.b16 %v1679, %v1677
        %v1689 = vlaneseq
        %v1690 = vshrl.u32 %v1689, 7
        %v1691 = vsub.s32 0, %v1690
        %v1692 = vrot.slane %v1667, %v1691
        %v1693 = vlaneseq
        %v1694 = vshrl.u32 %v1693, 7
        %v1695 = vsub.s32 1, %v1694
        %v1696 = vrot.slane %v1667, %v1695
        %v1700 = vsel %vm1101, %v1666, 0
        %1702 = vmatprep.subr.bf16.mxu0 %v1681
        %1703 = vmatpush1.bf16.msra.mxu0 %v1680
        %1704 = vmatprep.subr.bf16.mxu0 %v1683
        %1705 = vmatpush1.bf16.msra.mxu0 %v1682
        %1706 = vmatprep.subr.bf16.mxu0 0
        %1707 = vmatpush1.bf16.msra.mxu0 0
        %1708 = vmatprep.subr.bf16.mxu0 0
        %1709 = vmatpush1.bf16.msra.mxu0 0
        %1710 = vmatprep.subr.bf16.mxu0 0
        %1711 = vmatpush1.bf16.msra.mxu0 0
        %1712 = vmatprep.subr.bf16.mxu0 0
        %1713 = vmatpush1.bf16.msra.mxu0 0
        %1714 = vmatprep.subr.bf16.mxu0 0
        %1715 = vmatpush1.bf16.msra.mxu0 0
        %1716 = vmatprep.subr.bf16.mxu0 0
        %1717 = vmatpush1.bf16.msra.mxu0 0
        %1718 = vmatprep.subr.bf16.mxu0 0
        %1719 = vmatpush1.bf16.msra.mxu0 0
        %1720 = vmatprep.subr.bf16.mxu0 0
        %1721 = vmatpush1.bf16.msra.mxu0 0
        %1722 = vmatprep.subr.bf16.mxu0 0
        %1723 = vmatpush1.bf16.msra.mxu0 0
        %1724 = vmatprep.subr.bf16.mxu0 0
        %1725 = vmatpush1.bf16.msra.mxu0 0
        %1726 = vmatprep.subr.bf16.mxu0 0
        %1727 = vmatpush1.bf16.msra.mxu0 0
        %1728 = vmatprep.subr.bf16.mxu0 0
        %1729 = vmatpush1.bf16.msra.mxu0 0
        %1730 = vmatprep.subr.bf16.mxu0 0
        %1731 = vmatpush1.bf16.msra.mxu0 0
        %1732 = vmatprep.subr.bf16.mxu0 0
        %1733 = vmatpush1.bf16.msra.mxu0 0
        %1734 = vmatprep.mubr.bf16.mxu0 0
        %1735 = vmatmul.mubr.bf16.gmra.mrb[0].mxu0 %v1700
        %v1736 = vpop.f32.mrb[0].mxu0
        %v1737 = vadd.f32 %v1692, %v1736
        %v1738 = vpop.f32.mrb[0].mxu0
        %v1739 = vadd.f32 %v1696, %v1738
        %v1740 = vpop.f32.mrb[0].mxu0
        %v1741 = vpop.f32.mrb[0].mxu0
        %1742 = vdwg.mxu0
        %v1743 = vmax.f32 %v1737, 0.0
        %v1744 = vmax.f32 %v1739, 0.0
        %v1745 = vld [vmem:[#allocation26] sm:$0xf]
        %v1746 = vld [vmem:[#allocation26 + $0x4] sm:$0xf]
        %v1747 = vld [vmem:[#allocation26 + $0x8] sm:$0xf]
        %v1748 = vld [vmem:[#allocation26 + $0xc] sm:$0xf]
        %v1749 = vld [vmem:[#allocation26 + $0x10] sm:$0xf]
        %v1750 = vld [vmem:[#allocation26 + $0x14] sm:$0xf]
        %v1751 = vld [vmem:[#allocation26 + $0x18] sm:$0xf]
        %v1752 = vld [vmem:[#allocation26 + $0x1c] sm:$0xf]
        %v1753 = vld [vmem:[#allocation26 + $0x20] sm:$0xf]
        %v1754 = vld [vmem:[#allocation26 + $0x24] sm:$0xf]
        %v1755 = vld [vmem:[#allocation26 + $0x28] sm:$0xf]
        %v1756 = vld [vmem:[#allocation26 + $0x2c] sm:$0xf]
        %v1757 = vld [vmem:[#allocation26 + $0x30] sm:$0xf]
        %v1758 = vld [vmem:[#allocation26 + $0x34] sm:$0xf]
        %v1759 = vld [vmem:[#allocation26 + $0x38] sm:$0xf]
        %v1760 = vld [vmem:[#allocation26 + $0x3c] sm:$0xf]
        %v1761 = vld [vmem:[#allocation26 + $0x40] sm:$0xf]
        %v1762 = vld [vmem:[#allocation26 + $0x44] sm:$0xf]
        %v1763 = vld [vmem:[#allocation26 + $0x48] sm:$0xf]
        %v1764 = vld [vmem:[#allocation26 + $0x4c] sm:$0xf]
        %v1765 = vld [vmem:[#allocation26 + $0x50] sm:$0xf]
        %v1766 = vld [vmem:[#allocation26 + $0x54] sm:$0xf]
        %v1767 = vld [vmem:[#allocation26 + $0x58] sm:$0xf]
        %v1768 = vld [vmem:[#allocation26 + $0x5c] sm:$0xf]
        %v1769 = vld [vmem:[#allocation26 + $0x60] sm:$0xf]
        %v1770 = vld [vmem:[#allocation26 + $0x64] sm:$0xf]
        %v1771 = vld [vmem:[#allocation26 + $0x68] sm:$0xf]
        %v1772 = vld [vmem:[#allocation26 + $0x6c] sm:$0xf]
        %v1773 = vld [vmem:[#allocation26 + $0x70] sm:$0xf]
        %v1774 = vld [vmem:[#allocation26 + $0x74] sm:$0xf]
        %v1775 = vld [vmem:[#allocation26 + $0x78] sm:$0xf]
        %v1776 = vld [vmem:[#allocation26 + $0x7c] sm:$0xf]
        %v1777 = vpack.c.bf16 %v1743, %v1743
        %v1778 = vpack.c.bf16 %v1744, %v1744
        %v1779 = vld [vmem:[#allocation28] sm:$0x1]
        %v1812 = vunpack.c.l.b16 %v1745
        %v1813 = vunpack.c.l.b16 %v1746
        %v1814 = vunpack.c.l.b16 %v1747
        %v1815 = vunpack.c.l.b16 %v1748
        %v1816 = vunpack.c.l.b16 %v1749
        %v1817 = vunpack.c.l.b16 %v1750
        %v1818 = vunpack.c.l.b16 %v1751
        %v1819 = vunpack.c.l.b16 %v1752
        %v1820 = vunpack.c.l.b16 %v1753
        %v1821 = vunpack.c.l.b16 %v1754
        %v1822 = vunpack.c.l.b16 %v1755
        %v1823 = vunpack.c.l.b16 %v1756
        %v1824 = vunpack.c.l.b16 %v1757
        %v1825 = vunpack.c.l.b16 %v1758
        %v1826 = vunpack.c.l.b16 %v1759
        %v1827 = vunpack.c.l.b16 %v1760
        %v1828 = vunpack.c.l.b16 %v1761
        %v1829 = vunpack.c.l.b16 %v1762
        %v1830 = vunpack.c.l.b16 %v1763
        %v1831 = vunpack.c.l.b16 %v1764
        %v1832 = vunpack.c.l.b16 %v1765
        %v1833 = vunpack.c.l.b16 %v1766
        %v1834 = vunpack.c.l.b16 %v1767
        %v1835 = vunpack.c.l.b16 %v1768
        %v1836 = vunpack.c.l.b16 %v1769
        %v1837 = vunpack.c.l.b16 %v1770
        %v1838 = vunpack.c.l.b16 %v1771
        %v1839 = vunpack.c.l.b16 %v1772
        %v1840 = vunpack.c.l.b16 %v1773
        %v1841 = vunpack.c.l.b16 %v1774
        %v1842 = vunpack.c.l.b16 %v1775
        %v1843 = vunpack.c.l.b16 %v1776
        %v1844 = vpack.c.b16 %v1813, %v1812
        %v1845 = vpack.c.b16 %v1815, %v1814
        %v1846 = vpack.c.b16 %v1817, %v1816
        %v1847 = vpack.c.b16 %v1819, %v1818
        %v1848 = vpack.c.b16 %v1821, %v1820
        %v1849 = vpack.c.b16 %v1823, %v1822
        %v1850 = vpack.c.b16 %v1825, %v1824
        %v1851 = vpack.c.b16 %v1827, %v1826
        %v1852 = vpack.c.b16 %v1829, %v1828
        %v1853 = vpack.c.b16 %v1831, %v1830
        %v1854 = vpack.c.b16 %v1833, %v1832
        %v1855 = vpack.c.b16 %v1835, %v1834
        %v1856 = vpack.c.b16 %v1837, %v1836
        %v1857 = vpack.c.b16 %v1839, %v1838
        %v1858 = vpack.c.b16 %v1841, %v1840
        %v1859 = vpack.c.b16 %v1843, %v1842
        %1876 = vmatprep.subr.bf16.mxu0 0
        %1877 = vmatpush1.bf16.msra.mxu0 %v1844
        %1878 = vmatprep.subr.bf16.mxu0 0
        %1879 = vmatpush1.bf16.msra.mxu0 %v1845
        %1880 = vmatprep.subr.bf16.mxu0 0
        %1881 = vmatpush1.bf16.msra.mxu0 %v1846
        %1882 = vmatprep.subr.bf16.mxu0 0
        %1883 = vmatpush1.bf16.msra.mxu0 %v1847
        %1884 = vmatprep.subr.bf16.mxu0 0
        %1885 = vmatpush1.bf16.msra.mxu0 %v1848
        %1886 = vmatprep.subr.bf16.mxu0 0
        %1887 = vmatpush1.bf16.msra.mxu0 %v1849
        %1888 = vmatprep.subr.bf16.mxu0 0
        %1889 = vmatpush1.bf16.msra.mxu0 %v1850
        %1890 = vmatprep.subr.bf16.mxu0 0
        %1891 = vmatpush1.bf16.msra.mxu0 %v1851
        %1892 = vmatprep.subr.bf16.mxu0 0
        %1893 = vmatpush1.bf16.msra.mxu0 %v1852
        %1894 = vmatprep.subr.bf16.mxu0 0
        %1895 = vmatpush1.bf16.msra.mxu0 %v1853
        %1896 = vmatprep.subr.bf16.mxu0 0
        %1897 = vmatpush1.bf16.msra.mxu0 %v1854
        %1898 = vmatprep.subr.bf16.mxu0 0
        %1899 = vmatpush1.bf16.msra.mxu0 %v1855
        %1900 = vmatprep.subr.bf16.mxu0 0
        %1901 = vmatpush1.bf16.msra.mxu0 %v1856
        %1902 = vmatprep.subr.bf16.mxu0 0
        %1903 = vmatpush1.bf16.msra.mxu0 %v1857
        %1904 = vmatprep.subr.bf16.mxu0 0
        %1905 = vmatpush1.bf16.msra.mxu0 %v1858
        %1906 = vmatprep.subr.bf16.mxu0 0
        %1907 = vmatpush1.bf16.msra.mxu0 %v1859
        %1908 = vmatprep.mubr.bf16.mxu0 %v1778
        %1909 = vmatmul.mubr.bf16.gmra.mrb[0].mxu0 %v1777
        %v1910 = vpop.f32.mrb[0].mxu0
        %v1911 = vadd.f32 %v1779, %v1910
        %v1912 = vpop.f32.mrb[0].mxu0
        %v1913 = vpop.f32.mrb[0].mxu0
        %v1914 = vpop.f32.mrb[0].mxu0
        %1915 = vdwg.mxu0
        %1916 = vst [vmem:[%s1063] sm:$0x1] %v1911
        %v1917 = vld [vmem:[#allocation29] sm:$0xff]
        %v1918 = vld [vmem:[#allocation29 + $0x8] sm:$0xff]
        %v1919 = vld [vmem:[#allocation29 + $0x10] sm:$0xff]
        %v1920 = vld [vmem:[#allocation29 + $0x18] sm:$0xff]
        %v1921 = vpack.c.bf16 %v1554, %v1554
        %v1922 = vld [vmem:[#allocation31] sm:$0x3]
        %v1924 = vlaneseq
        %v1925 = vshrl.u32 %v1924, 7
        %v1926 = vsub.s32 0, %v1925
        %v1927 = vrot.slane %v1922, %v1926
        %v1928 = vlaneseq
        %v1929 = vshrl.u32 %v1928, 7
        %v1930 = vsub.s32 1, %v1929
        %v1931 = vrot.slane %v1922, %v1930
        %v1938 = vunpack.c.l.b16 %v1917
        %v1939 = vunpack.c.h.b16 %v1917
        %v1940 = vunpack.c.l.b16 %v1918
        %v1941 = vunpack.c.h.b16 %v1918
        %v1942 = vunpack.c.l.b16 %v1919
        %v1943 = vunpack.c.h.b16 %v1919
        %v1944 = vunpack.c.l.b16 %v1920
        %v1945 = vunpack.c.h.b16 %v1920
        %v1946 = vpack.c.b16 %v1940, %v1938
        %v1947 = vpack.c.b16 %v1941, %v1939
        %v1948 = vpack.c.b16 %v1944, %v1942
        %v1949 = vpack.c.b16 %v1945, %v1943
        %v1955 = vsel %vm1101, %v1921, 0
        %1957 = vmatprep.subr.bf16.mxu0 %v1947
        %1958 = vmatpush1.bf16.msra.mxu0 %v1946
        %1959 = vmatprep.subr.bf16.mxu0 %v1949
        %1960 = vmatpush1.bf16.msra.mxu0 %v1948
        %1961 = vmatprep.subr.bf16.mxu0 0
        %1962 = vmatpush1.bf16.msra.mxu0 0
        %1963 = vmatprep.subr.bf16.mxu0 0
        %1964 = vmatpush1.bf16.msra.mxu0 0
        %1965 = vmatprep.subr.bf16.mxu0 0
        %1966 = vmatpush1.bf16.msra.mxu0 0
        %1967 = vmatprep.subr.bf16.mxu0 0
        %1968 = vmatpush1.bf16.msra.mxu0 0
        %1969 = vmatprep.subr.bf16.mxu0 0
        %1970 = vmatpush1.bf16.msra.mxu0 0
        %1971 = vmatprep.subr.bf16.mxu0 0
        %1972 = vmatpush1.bf16.msra.mxu0 0
        %1973 = vmatprep.subr.bf16.mxu0 0
        %1974 = vmatpush1.bf16.msra.mxu0 0
        %1975 = vmatprep.subr.bf16.mxu0 0
        %1976 = vmatpush1.bf16.msra.mxu0 0
        %1977 = vmatprep.subr.bf16.mxu0 0
        %1978 = vmatpush1.bf16.msra.mxu0 0
        %1979 = vmatprep.subr.bf16.mxu0 0
        %1980 = vmatpush1.bf16.msra.mxu0 0
        %1981 = vmatprep.subr.bf16.mxu0 0
        %1982 = vmatpush1.bf16.msra.mxu0 0
        %1983 = vmatprep.subr.bf16.mxu0 0
        %1984 = vmatpush1.bf16.msra.mxu0 0
        %1985 = vmatprep.subr.bf16.mxu0 0
        %1986 = vmatpush1.bf16.msra.mxu0 0
        %1987 = vmatprep.subr.bf16.mxu0 0
        %1988 = vmatpush1.bf16.msra.mxu0 0
        %1989 = vmatprep.mubr.bf16.mxu0 0
        %1990 = vmatmul.mubr.bf16.gmra.mrb[0].mxu0 %v1955
        %v1991 = vpop.f32.mrb[0].mxu0
        %v1992 = vadd.f32 %v1927, %v1991
        %v1993 = vpop.f32.mrb[0].mxu0
        %v1994 = vadd.f32 %v1931, %v1993
        %v1995 = vpop.f32.mrb[0].mxu0
        %v1996 = vpop.f32.mrb[0].mxu0
        %1997 = vdwg.mxu0
        %v1998 = vmax.f32 %v1992, 0.0
        %v1999 = vmax.f32 %v1994, 0.0
        %v2000 = vld [vmem:[%s22] sm:$0xf]
        %v2001 = vld [vmem:[%s22 + $0x4] sm:$0xf]
        %v2002 = vld [vmem:[%s22 + $0x8] sm:$0xf]
        %v2003 = vld [vmem:[%s22 + $0xc] sm:$0xf]
        %v2004 = vld [vmem:[%s22 + $0x10] sm:$0xf]
        %v2005 = vld [vmem:[%s22 + $0x14] sm:$0xf]
        %v2006 = vld [vmem:[%s22 + $0x18] sm:$0xf]
        %v2007 = vld [vmem:[%s22 + $0x1c] sm:$0xf]
        %v2008 = vld [vmem:[%s22 + $0x20] sm:$0xf]
        %v2009 = vld [vmem:[%s22 + $0x24] sm:$0xf]
        %v2010 = vld [vmem:[%s22 + $0x28] sm:$0xf]
        %v2011 = vld [vmem:[%s22 + $0x2c] sm:$0xf]
        %v2012 = vld [vmem:[%s22 + $0x30] sm:$0xf]
        %v2013 = vld [vmem:[%s22 + $0x34] sm:$0xf]
        %v2014 = vld [vmem:[%s22 + $0x38] sm:$0xf]
        %v2015 = vld [vmem:[%s22 + $0x3c] sm:$0xf]
        %v2016 = vld [vmem:[%s22 + $0x40] sm:$0xf]
        %v2017 = vld [vmem:[%s22 + $0x44] sm:$0xf]
        %v2018 = vld [vmem:[%s22 + $0x48] sm:$0xf]
        %v2019 = vld [vmem:[%s22 + $0x4c] sm:$0xf]
        %v2020 = vld [vmem:[%s22 + $0x50] sm:$0xf]
        %v2021 = vld [vmem:[%s22 + $0x54] sm:$0xf]
        %v2022 = vld [vmem:[%s22 + $0x58] sm:$0xf]
        %v2023 = vld [vmem:[%s22 + $0x5c] sm:$0xf]
        %v2024 = vld [vmem:[%s22 + $0x60] sm:$0xf]
        %v2025 = vld [vmem:[%s22 + $0x64] sm:$0xf]
        %v2026 = vld [vmem:[%s22 + $0x68] sm:$0xf]
        %v2027 = vld [vmem:[%s22 + $0x6c] sm:$0xf]
        %v2028 = vld [vmem:[%s22 + $0x70] sm:$0xf]
        %v2029 = vld [vmem:[%s22 + $0x74] sm:$0xf]
        %v2030 = vld [vmem:[%s22 + $0x78] sm:$0xf]
        %v2031 = vld [vmem:[%s22 + $0x7c] sm:$0xf]
        %v2032 = vpack.c.bf16 %v1998, %v1998
        %v2033 = vpack.c.bf16 %v1999, %v1999
        %v2034 = vld [vmem:[%s23] sm:$0x1]
        %v2036 = vlaneseq
        %v2037 = vshrl.u32 %v2036, 7
        %v2038 = vsub.s32 0, %v2037
        %v2039 = vrot.slane %v2034, %v2038
        %v2073 = vunpack.c.l.b16 %v2000
        %v2074 = vunpack.c.l.b16 %v2001
        %v2075 = vunpack.c.l.b16 %v2002
        %v2076 = vunpack.c.l.b16 %v2003
        %v2077 = vunpack.c.l.b16 %v2004
        %v2078 = vunpack.c.l.b16 %v2005
        %v2079 = vunpack.c.l.b16 %v2006
        %v2080 = vunpack.c.l.b16 %v2007
        %v2081 = vunpack.c.l.b16 %v2008
        %v2082 = vunpack.c.l.b16 %v2009
        %v2083 = vunpack.c.l.b16 %v2010
        %v2084 = vunpack.c.l.b16 %v2011
        %v2085 = vunpack.c.l.b16 %v2012
        %v2086 = vunpack.c.l.b16 %v2013
        %v2087 = vunpack.c.l.b16 %v2014
        %v2088 = vunpack.c.l.b16 %v2015
        %v2089 = vunpack.c.l.b16 %v2016
        %v2090 = vunpack.c.l.b16 %v2017
        %v2091 = vunpack.c.l.b16 %v2018
        %v2092 = vunpack.c.l.b16 %v2019
        %v2093 = vunpack.c.l.b16 %v2020
        %v2094 = vunpack.c.l.b16 %v2021
        %v2095 = vunpack.c.l.b16 %v2022
        %v2096 = vunpack.c.l.b16 %v2023
        %v2097 = vunpack.c.l.b16 %v2024
        %v2098 = vunpack.c.l.b16 %v2025
        %v2099 = vunpack.c.l.b16 %v2026
        %v2100 = vunpack.c.l.b16 %v2027
        %v2101 = vunpack.c.l.b16 %v2028
        %v2102 = vunpack.c.l.b16 %v2029
        %v2103 = vunpack.c.l.b16 %v2030
        %v2104 = vunpack.c.l.b16 %v2031
        %v2105 = vpack.c.b16 %v2074, %v2073
        %v2106 = vpack.c.b16 %v2076, %v2075
        %v2107 = vpack.c.b16 %v2078, %v2077
        %v2108 = vpack.c.b16 %v2080, %v2079
        %v2109 = vpack.c.b16 %v2082, %v2081
        %v2110 = vpack.c.b16 %v2084, %v2083
        %v2111 = vpack.c.b16 %v2086, %v2085
        %v2112 = vpack.c.b16 %v2088, %v2087
        %v2113 = vpack.c.b16 %v2090, %v2089
        %v2114 = vpack.c.b16 %v2092, %v2091
        %v2115 = vpack.c.b16 %v2094, %v2093
        %v2116 = vpack.c.b16 %v2096, %v2095
        %v2117 = vpack.c.b16 %v2098, %v2097
        %v2118 = vpack.c.b16 %v2100, %v2099
        %v2119 = vpack.c.b16 %v2102, %v2101
        %v2120 = vpack.c.b16 %v2104, %v2103
        %2137 = vmatprep.subr.bf16.mxu0 0
        %2138 = vmatpush1.bf16.msra.mxu0 %v2105
        %2139 = vmatprep.subr.bf16.mxu0 0
        %2140 = vmatpush1.bf16.msra.mxu0 %v2106
        %2141 = vmatprep.subr.bf16.mxu0 0
        %2142 = vmatpush1.bf16.msra.mxu0 %v2107
        %2143 = vmatprep.subr.bf16.mxu0 0
        %2144 = vmatpush1.bf16.msra.mxu0 %v2108
        %2145 = vmatprep.subr.bf16.mxu0 0
        %2146 = vmatpush1.bf16.msra.mxu0 %v2109
        %2147 = vmatprep.subr.bf16.mxu0 0
        %2148 = vmatpush1.bf16.msra.mxu0 %v2110
        %2149 = vmatprep.subr.bf16.mxu0 0
        %2150 = vmatpush1.bf16.msra.mxu0 %v2111
        %2151 = vmatprep.subr.bf16.mxu0 0
        %2152 = vmatpush1.bf16.msra.mxu0 %v2112
        %2153 = vmatprep.subr.bf16.mxu0 0
        %2154 = vmatpush1.bf16.msra.mxu0 %v2113
        %2155 = vmatprep.subr.bf16.mxu0 0
        %2156 = vmatpush1.bf16.msra.mxu0 %v2114
        %2157 = vmatprep.subr.bf16.mxu0 0
        %2158 = vmatpush1.bf16.msra.mxu0 %v2115
        %2159 = vmatprep.subr.bf16.mxu0 0
        %2160 = vmatpush1.bf16.msra.mxu0 %v2116
        %2161 = vmatprep.subr.bf16.mxu0 0
        %2162 = vmatpush1.bf16.msra.mxu0 %v2117
        %2163 = vmatprep.subr.bf16.mxu0 0
        %2164 = vmatpush1.bf16.msra.mxu0 %v2118
        %2165 = vmatprep.subr.bf16.mxu0 0
        %2166 = vmatpush1.bf16.msra.mxu0 %v2119
        %2167 = vmatprep.subr.bf16.mxu0 0
        %2168 = vmatpush1.bf16.msra.mxu0 %v2120
        %2169 = vmatprep.mubr.bf16.mxu0 %v2033
        %2170 = vmatmul.mubr.bf16.gmra.mrb[0].mxu0 %v2032
        %v2171 = vpop.f32.mrb[0].mxu0
        %v2172 = vadd.f32 %v2039, %v2171
        %v2173 = vpop.f32.mrb[0].mxu0
        %v2174 = vpop.f32.mrb[0].mxu0
        %v2175 = vpop.f32.mrb[0].mxu0
        %2176 = vdwg.mxu0
        %2177 = vst [vmem:[%s1070] sm:$0xff] %v2172
        %s2178 = sand.u32 %s578, 1
        %s2179 = scalar_lea.sflag [#allocation4], %s2178
        %s2180 = sand.u32 %s578, 1
        %s2181 = scalar_lea.vmem [#allocation32], %s2180
        %s2182 = sand.u32 %s56, 1
        %s2183 = scalar_lea.sflag [#allocation34], %s2182
        %s2184 = sand.u32 %s604, 1
        %s2185 = scalar_lea.vmem [#allocation33], %s2184
        %s2186 = sand.u32 %s56, 1
        %s2187 = scalar_lea.sflag [#allocation34], %s2186
        %s2188 = sand.u32 %s630, 1
        %s2189 = smul.addr %s2188, 8
        %s2190 = scalar_lea.vmem [#allocation35], %s2189
        // Predicated region
        $region193: #{tpu_custom_call.1} parent=115 // pred_check
          %p2191 = pneg %p588
        $region194: #{tpu_custom_call.1} parent=115 // pred_check_branch
          %2193 = sbr.rel (%p2191) target = $region196
        $region195: #{tpu_custom_call.1} parent=115 // pred_region
          %s2195 = ssub.s32 16, 16
          %2196 = vsyncadd %s2179, %s2195
          %s2197 = smul.addr %s56, 16
          %s2198 = scalar_lea.hbm %s24, %s2197
          %s2200 = sshll.u32 %s2181, 4
          %s2201 = int_to_ptr.vmem [resolvable:$true] %s2200
          %2203 = dma.vmem_to_hbm [thread:$0]  %s2201, 16, %s2198, %s2179
        $region196: #{tpu_custom_call.1} parent=115 // pred_fallthru
          _
        // Predicated region
        $region197: #{tpu_custom_call.1} parent=115 // pred_check
          %p2204 = pneg %p614
        $region198: #{tpu_custom_call.1} parent=115 // pred_check_branch
          %2206 = sbr.rel (%p2204) target = $region200
        $region199: #{tpu_custom_call.1} parent=115 // pred_region
          %s2208 = ssub.s32 16, 16
          %2209 = vsyncadd %s2183, %s2208
          %s2210 = smul.addr %s56, 16
          %s2211 = scalar_lea.hbm %s25, %s2210
          %s2213 = sshll.u32 %s2185, 4
          %s2214 = int_to_ptr.vmem [resolvable:$true] %s2213
          %2216 = dma.vmem_to_hbm [thread:$0]  %s2214, 16, %s2211, %s2183
        $region200: #{tpu_custom_call.1} parent=115 // pred_fallthru
          _
        // Predicated region
        $region201: #{tpu_custom_call.1} parent=115 // pred_check
          %p2217 = pneg %p640
        $region202: #{tpu_custom_call.1} parent=115 // pred_check_branch
          %2219 = sbr.rel (%p2217) target = $region204
        $region203: #{tpu_custom_call.1} parent=115 // pred_region
          %s2221 = ssub.s32 128, 128
          %2222 = vsyncadd %s2187, %s2221
          %s2223 = smul.addr %s56, 128
          %s2224 = scalar_lea.hbm %s26, %s2223
          %s2226 = sshll.u32 %s2190, 4
          %s2227 = int_to_ptr.vmem [resolvable:$true] %s2226
          %2229 = dma.vmem_to_hbm [thread:$0]  %s2227, 128, %s2224, %s2187
        $region204: #{tpu_custom_call.1} parent=115 // pred_fallthru
          _
      $region116: #{tpu_custom_call.1} parent=5 // pred_fallthru
        _
      %p2230 = scmp.le.s32.totalorder 2, %s51
      // Predicated region
      $region205: #{tpu_custom_call.1} parent=5 // pred_check
        %p2231 = pneg %p2230
      $region206: #{tpu_custom_call.1} parent=5 // pred_check_branch
        %2233 = sbr.rel (%p2231) target = $region208
      $region207: #{tpu_custom_call.1} parent=5 // pred_region
        %s2234 = ssub.s32 %s51, 2
        // Predicated region
        $region209: #{tpu_custom_call.1} parent=207 // pred_check
          %p2235 = pneg %p594
        $region210: #{tpu_custom_call.1} parent=207 // pred_check_branch
          %2237 = sbr.rel (%p2235) target = $region212
        $region211: #{tpu_custom_call.1} parent=207 // pred_region
          %s2238 = sand.u32 %s579, 1
          %s2239 = scalar_lea.sflag [#allocation4], %s2238
          %s2240 = sand.u32 %s579, 1
          %s2241 = scalar_lea.vmem [#allocation32], %s2240
          %2242 = dma.done %s2239, 16
        $region212: #{tpu_custom_call.1} parent=207 // pred_fallthru
          _
        // Predicated region
        $region213: #{tpu_custom_call.1} parent=207 // pred_check
          %p2243 = pneg %p620
        $region214: #{tpu_custom_call.1} parent=207 // pred_check_branch
          %2245 = sbr.rel (%p2243) target = $region216
        $region215: #{tpu_custom_call.1} parent=207 // pred_region
          %s2246 = sand.u32 %s57, 1
          %s2247 = scalar_lea.sflag [#allocation34], %s2246
          %s2248 = sand.u32 %s605, 1
          %s2249 = scalar_lea.vmem [#allocation33], %s2248
          %2250 = dma.done %s2247, 16
        $region216: #{tpu_custom_call.1} parent=207 // pred_fallthru
          _
        // Predicated region
        $region217: #{tpu_custom_call.1} parent=207 // pred_check
          %p2251 = pneg %p646
        $region218: #{tpu_custom_call.1} parent=207 // pred_check_branch
          %2253 = sbr.rel (%p2251) target = $region220
        $region219: #{tpu_custom_call.1} parent=207 // pred_region
          %s2254 = sand.u32 %s57, 1
          %s2255 = scalar_lea.sflag [#allocation34], %s2254
          %s2256 = sand.u32 %s631, 1
          %s2257 = smul.addr %s2256, 8
          %s2258 = scalar_lea.vmem [#allocation35], %s2257
          %2259 = dma.done %s2255, 128
        $region220: #{tpu_custom_call.1} parent=207 // pred_fallthru
          _
      $region208: #{tpu_custom_call.1} parent=5 // pred_fallthru
        _
    $region6: #{tpu_custom_call.1} parent=1 // loop_footer
      %s55 = sadd.s32 1, %s51
    $region7: #{tpu_custom_call.1} parent=1 // loop_footer_branch
      %50 = sbr.rel target = $region3
    $region8: #{tpu_custom_call.1} parent=1 // loop_exit
      _
    %2260 = vsyncpa [#allocation3], 1
    %s2261 = scalar_lea.sflag [#allocation3], 1
    %2262 = vsyncpa %s2261, 1
    %2263 = vsyncpa [#allocation6], 1
    %2264 = vsyncpa [#allocation9], 1
    %2265 = vsyncpa [#allocation12], 1
    %2266 = vsyncpa [#allocation15], 1
    %2267 = vsyncpa [#allocation18], 1
    %2268 = vsyncpa [#allocation21], 1
    %2269 = vsyncpa [#allocation24], 1
    %2270 = vsyncpa [#allocation27], 1
    %2271 = vsyncpa [#allocation30], 1
    %2272 = vsyncpa [#allocation4], 1
    %s2273 = scalar_lea.sflag [#allocation4], 1
    %2274 = vsyncpa %s2273, 1
    %2275 = vsyncpa [#allocation34], 1
    %s2276 = scalar_lea.sflag [#allocation34], 1
    %2277 = vsyncpa %s2276, 1

</llo_original>
